<compile_context>
chip_gen: v5e
topology: v5e:2x2
jax: 0.10.0
libtpu: 0.0.40
codegen_flags: <defaults>
</compile_context>

<pallas_src>
import functools

import jax
import jax.numpy as jnp
from jax.experimental import pallas as pl
from jax.experimental.pallas import tpu as pltpu


# ---------------------------------------------------------------------------
# Fused kernel: ReLU-MLP x2 -> LSTM input projection -> LSTM recurrence -> FC
# Grid: (num_time_chunks,), sequential ("arbitrary").
# ---------------------------------------------------------------------------
def _fused_rnndyn_kernel(
    x_ref, w0_ref, b0_ref, w1_ref, b1_ref,
    wih_ref, whh_ref, bl_ref, wfc_ref, bfc_ref,
    y_ref, hn_ref, cn_ref,
    xg_scr, yl_scr,
    *, hidden_init, chunk_t, b_pad, hdim, t_total, unroll, has_tail):
    chunk = pl.program_id(0)

    # h / c persist across chunks inside the grid-resident hn/cn output blocks.
    @pl.when(chunk == 0)
    def _():
        hn_ref[...] = jnp.full(hn_ref.shape, hidden_init, hn_ref.dtype)
        cn_ref[...] = jnp.full(cn_ref.shape, hidden_init, cn_ref.dtype)

    # ---- time-parallel part: big MXU matmuls over the whole chunk ----------
    x = x_ref[...]                                            # (rows, Din)
    h = jnp.dot(x, w0_ref[...], preferred_element_type=jnp.float32) + b0_ref[...]
    h = jnp.maximum(h, 0.0)
    h = jnp.dot(h, w1_ref[...], preferred_element_type=jnp.float32) + b1_ref[...]
    h = jnp.maximum(h, 0.0)
    # LSTM input projection for every timestep in the chunk (hoisted out of
    # the recurrence), stored to VMEM scratch.
    xg_scr[...] = (
        jnp.dot(h, wih_ref[...], preferred_element_type=jnp.float32) + bl_ref[...]
    )                                                         # (rows, 4H)

    # ---- sequential recurrence: only h @ W_hh + gate math per step ---------
    whh = whh_ref[...]                                        # (H, 4H) in vregs

    def run_recurrence(masked):
        def step(t, carry):
            h_prev, c_prev = carry
            row = pl.multiple_of(t * b_pad, b_pad)            # 8-aligned offset
            g = xg_scr[pl.ds(row, b_pad), :] + jnp.dot(
                h_prev, whh, preferred_element_type=jnp.float32)  # (b_pad, 4H)
            # One full-width sigmoid + one full-width tanh over the single
            # (b_pad, 4H) vreg, then take the 32-lane gate slices.
            sig = jax.nn.sigmoid(g)
            th = jnp.tanh(g)
            i_g = sig[:, 0 * hdim:1 * hdim]
            f_g = sig[:, 1 * hdim:2 * hdim]
            g_g = th[:, 2 * hdim:3 * hdim]
            o_g = sig[:, 3 * hdim:4 * hdim]
            c_new = f_g * c_prev + i_g * g_g
            h_new = o_g * jnp.tanh(c_new)
            if masked:
                # Only the last (padded) chunk pays for tail masking.
                valid = (chunk * chunk_t + t) < t_total
                h_new = jnp.where(valid, h_new, h_prev)
                c_new = jnp.where(valid, c_new, c_prev)
            yl_scr[pl.ds(row, b_pad), :] = h_new
            return h_new, c_new

        h_f, c_f = jax.lax.fori_loop(
            0, chunk_t, step, (hn_ref[...], cn_ref[...]), unroll=unroll)
        hn_ref[...] = h_f
        cn_ref[...] = c_f

    if not has_tail:
        run_recurrence(False)        # tc divides T: never emit the masked body
    else:
        last = pl.num_programs(0) - 1

        @pl.when(chunk < last)
        def _():
            run_recurrence(False)    # full chunks: unmasked critical path

        @pl.when(chunk == last)
        def _():
            run_recurrence(True)     # only the tail chunk masks padded steps

    # ---- time-parallel output FC for the whole chunk (single bulk store) ---
    y = jnp.dot(yl_scr[...], wfc_ref[...], preferred_element_type=jnp.float32)
    y_ref[...] = (y + bfc_ref[...]).astype(y_ref.dtype)


# ---------------------------------------------------------------------------
# Chunk size: sized against the lane-padded VMEM footprint, not logical dims.
# Budget 24 MiB (fits the 32 MiB scoped default on v7x and is trivially safe
# on v5e/v6e 128 MiB parts); hard cap 512 per the v7x guidance.
# ---------------------------------------------------------------------------
def _pick_chunk_t(T, b_pad, Din, H, Dout, chunk_t=None):
    if chunk_t is not None:
        return max(1, min(int(chunk_t), T))
    lane = 128
    pad = lambda d: ((d + lane - 1) // lane) * lane
    # f32 bytes per (timestep x batch-row): x (double-buffered) + y (double-
    # buffered) + gate scratch + lstm-output scratch, all lane-padded.
    per_row = 4 * (2 * pad(Din) + 2 * pad(Dout) + pad(4 * H) + pad(H))
    budget = 24 * 1024 * 1024
    tc = max(1, budget // (per_row * b_pad))
    return int(min(tc, 512, T))


# ---------------------------------------------------------------------------
# Wrapper: padding, BlockSpecs, grid over time chunks.
# ---------------------------------------------------------------------------
def rnndyn_forward(params, x, hidden_init=0.0, chunk_t=None):
    """Pallas implementation of RNNDyn.forward_sample.
    x: (T, B, dim_in) float32, time-major. Returns (output, (h_n, c_n))."""
    T, B, Din = x.shape
    assert T >= 1, "empty sequence not supported"
    H = params["lstm_w_hh"].shape[0]
    H1 = params["relu0_w"].shape[1]
    Dout = params["fc_w"].shape[1]
    dtype = x.dtype

    # Pad batch to a sublane multiple (aligned per-step scratch slices) and
    # time up to a whole number of chunks.
    b_pad = ((B + 7) // 8) * 8
    tc = _pick_chunk_t(T, b_pad, Din, H, Dout, chunk_t)
    n_chunks = pl.cdiv(T, tc)
    t_pad = n_chunks * tc
    rows = tc * b_pad
    has_tail = (t_pad != T)

    # Skip the zero-pad copy entirely when no padding is required.
    if (b_pad == B) and (t_pad == T):
        x_flat = x.reshape(T * B, Din)
    else:
        x_p = jnp.zeros((t_pad, b_pad, Din), dtype).at[:T, :B, :].set(x)
        x_flat = x_p.reshape(t_pad * b_pad, Din)

    b0 = params["relu0_b"].reshape(1, H1)
    b1 = params["relu1_b"].reshape(1, H1)
    bl = params["lstm_b"].reshape(1, 4 * H)
    bfc = params["fc_b"].reshape(1, Dout)

    # Deep unroll so the LLO scheduler hides xg loads / yl stores of steps
    # t+1..t+k under step t's gate-math / MXU latency.
    unroll = True if tc <= 32 else 16

    grid_spec = pltpu.PrefetchScalarGridSpec(
        num_scalar_prefetch=0,
        grid=(n_chunks,),
        in_specs=[
            pl.BlockSpec((rows, Din), lambda i: (i, 0)),            # x chunk
            pl.BlockSpec(params["relu0_w"].shape, lambda i: (0, 0)),
            pl.BlockSpec((1, H1), lambda i: (0, 0)),
            pl.BlockSpec(params["relu1_w"].shape, lambda i: (0, 0)),
            pl.BlockSpec((1, H1), lambda i: (0, 0)),
            pl.BlockSpec(params["lstm_w_ih"].shape, lambda i: (0, 0)),
            pl.BlockSpec(params["lstm_w_hh"].shape, lambda i: (0, 0)),
            pl.BlockSpec((1, 4 * H), lambda i: (0, 0)),
            pl.BlockSpec(params["fc_w"].shape, lambda i: (0, 0)),
            pl.BlockSpec((1, Dout), lambda i: (0, 0)),
        ],
        out_specs=[
            pl.BlockSpec((rows, Dout), lambda i: (i, 0)),           # y chunk
            pl.BlockSpec((b_pad, H), lambda i: (0, 0)),             # h_n (resident)
            pl.BlockSpec((b_pad, H), lambda i: (0, 0)),             # c_n (resident)
        ],
        scratch_shapes=[
            pltpu.VMEM((rows, 4 * H), jnp.float32),                 # gate pre-acts
            pltpu.VMEM((rows, H), jnp.float32),                     # lstm outputs
        ],
    )

    out_shape = (
        jax.ShapeDtypeStruct((t_pad * b_pad, Dout), dtype),
        jax.ShapeDtypeStruct((b_pad, H), jnp.float32),
        jax.ShapeDtypeStruct((b_pad, H), jnp.float32),
    )

    y_flat, h_n, c_n = pl.pallas_call(
        functools.partial(
            _fused_rnndyn_kernel,
            hidden_init=float(hidden_init),
            chunk_t=tc, b_pad=b_pad, hdim=H, t_total=T,
            unroll=unroll, has_tail=has_tail),
        out_shape=out_shape,
        grid_spec=grid_spec,
        compiler_params=pltpu.CompilerParams(
            dimension_semantics=("arbitrary",),       # time must be sequential
            vmem_limit_bytes=32 * 1024 * 1024),       # safe on v5e/v6e/v7x
    )(x_flat, params["relu0_w"], b0, params["relu1_w"], b1,
      params["lstm_w_ih"], params["lstm_w_hh"], bl,
      params["fc_w"], bfc)

    y = y_flat.reshape(t_pad, b_pad, Dout)[:T, :B, :]
    h_n = h_n[:B].astype(dtype)
    c_n = c_n[:B].astype(dtype)
    # dropout = 0.0 -> identity (eval behaviour)
    return y, (h_n[None, :, :], c_n[None, :, :])


# ---------------------------------------------------------------------------
# Parameters (torch Linear weight (out,in) stored transposed; LSTM gate order
# i, f, g, o; bias = bias_ih + bias_hh fused).
# ---------------------------------------------------------------------------
def init_params(key, dim_in=20, relu_dim=64, lstm_dim=32, fc_dim=16):
    ks = jax.random.split(key, 10)
    s = 0.1
    return {
        # group 1: 2x RELU 64
        "relu0_w": s * jax.random.normal(ks[0], (dim_in, relu_dim), jnp.float32),
        "relu0_b": s * jax.random.normal(ks[1], (relu_dim,), jnp.float32),
        "relu1_w": s * jax.random.normal(ks[2], (relu_dim, relu_dim), jnp.float32),
        "relu1_b": s * jax.random.normal(ks[3], (relu_dim,), jnp.float32),
        # group 2: 1x LSTM 32
        "lstm_w_ih": s * jax.random.normal(ks[4], (relu_dim, 4 * lstm_dim), jnp.float32),
        "lstm_w_hh": s * jax.random.normal(ks[5], (lstm_dim, 4 * lstm_dim), jnp.float32),
        "lstm_b": s * jax.random.normal(ks[6], (4 * lstm_dim,), jnp.float32),
        # group 3: 1x FC 16 (no nonlinearity)
        "fc_w": s * jax.random.normal(ks[7], (lstm_dim, fc_dim), jnp.float32),
        "fc_b": s * jax.random.normal(ks[8], (fc_dim,), jnp.float32),
    }


# ---------------------------------------------------------------------------
# Pure-JAX reference (sanity check)
# ---------------------------------------------------------------------------
def rnndyn_reference(params, x, hidden_init=0.0):
    T, B, _ = x.shape
    out = jnp.maximum(x @ params["relu0_w"] + params["relu0_b"], 0.0)
    out = jnp.maximum(out @ params["relu1_w"] + params["relu1_b"], 0.0)

    H = params["lstm_w_hh"].shape[0]
    h = jnp.full((B, H), hidden_init, jnp.float32)
    c = jnp.full((B, H), hidden_init, jnp.float32)

    def step(carry, x_t):
        h, c = carry
        g = x_t @ params["lstm_w_ih"] + h @ params["lstm_w_hh"] + params["lstm_b"]
        i = jax.nn.sigmoid(g[:, 0 * H:1 * H])
        f = jax.nn.sigmoid(g[:, 1 * H:2 * H])
        gg = jnp.tanh(g[:, 2 * H:3 * H])
        o = jax.nn.sigmoid(g[:, 3 * H:4 * H])
        c = f * c + i * gg
        h = o * jnp.tanh(c)
        return (h, c), h

    (h, c), ys = jax.lax.scan(step, (h, c), out)
    out = ys @ params["fc_w"] + params["fc_b"]
    return out, (h[None], c[None])


if __name__ == "__main__":
    T, B, DIM_IN = 8, 2, 20
    key = jax.random.PRNGKey(0)
    k_param, k_x = jax.random.split(key)

    params = init_params(k_param, dim_in=DIM_IN)
    x = jax.random.normal(k_x, (T, B, DIM_IN), jnp.float32)

    out, (h_n, c_n) = rnndyn_forward(params, x)
    out = jax.block_until_ready(out)
    h_n = jax.block_until_ready(h_n)
    c_n = jax.block_until_ready(c_n)

    # Also exercise the tail-masked path (tc that does not divide T).
    out2, (h_n2, c_n2) = rnndyn_forward(params, x, chunk_t=3)
    out2 = jax.block_until_ready(out2)

    # sanity check against pure-JAX reference
    ref_out, (ref_h, ref_c) = rnndyn_reference(params, x)
    assert out.shape == (T, B, 16)
    assert h_n.shape == (1, B, 32) and c_n.shape == (1, B, 32)
    assert jnp.allclose(out, ref_out, atol=2e-5, rtol=1e-5)
    assert jnp.allclose(h_n, ref_h, atol=2e-5, rtol=1e-5)
    assert jnp.allclose(c_n, ref_c, atol=2e-5, rtol=1e-5)
    assert jnp.allclose(out2, ref_out, atol=2e-5, rtol=1e-5)
    assert jnp.allclose(h_n2, ref_h, atol=2e-5, rtol=1e-5)
    assert jnp.allclose(c_n2, ref_c, atol=2e-5, rtol=1e-5)

    print("KERNEL_OK")
</pallas_src>

<mosaic_0001>
module attributes {stable_mosaic.version = 11 : i64} {
  func.func @_fused_rnndyn_kernel(%arg0: i32, %arg1: memref<64x20xf32, #tpu.memory_space<vmem>>, %arg2: memref<20x64xf32, #tpu.memory_space<vmem>>, %arg3: memref<1x64xf32, #tpu.memory_space<vmem>>, %arg4: memref<64x64xf32, #tpu.memory_space<vmem>>, %arg5: memref<1x64xf32, #tpu.memory_space<vmem>>, %arg6: memref<64x128xf32, #tpu.memory_space<vmem>>, %arg7: memref<32x128xf32, #tpu.memory_space<vmem>>, %arg8: memref<1x128xf32, #tpu.memory_space<vmem>>, %arg9: memref<32x16xf32, #tpu.memory_space<vmem>>, %arg10: memref<1x16xf32, #tpu.memory_space<vmem>>, %arg11: memref<64x16xf32, #tpu.memory_space<vmem>>, %arg12: memref<8x32xf32, #tpu.memory_space<vmem>>, %arg13: memref<8x32xf32, #tpu.memory_space<vmem>>, %arg14: memref<64x128xf32, #tpu.memory_space<vmem>>, %arg15: memref<64x32xf32, #tpu.memory_space<vmem>>) attributes {dimension_semantics = [#tpu.dimension_semantics<arbitrary>], iteration_bounds = array<i64: 1>, scalar_prefetch = 0 : i64, scratch_operands = 2 : i64, tpu.core_type = #tpu.core_type<tc>, window_params = [{transform_indices = @transform_0, window_bounds = array<i64: 64, 20>}, {pipeline_mode = #tpu.pipeline_mode<synchronous>, transform_indices = @transform_1, window_bounds = array<i64: 20, 64>}, {pipeline_mode = #tpu.pipeline_mode<synchronous>, transform_indices = @transform_2, window_bounds = array<i64: 1, 64>}, {pipeline_mode = #tpu.pipeline_mode<synchronous>, transform_indices = @transform_3, window_bounds = array<i64: 64, 64>}, {pipeline_mode = #tpu.pipeline_mode<synchronous>, transform_indices = @transform_4, window_bounds = array<i64: 1, 64>}, {pipeline_mode = #tpu.pipeline_mode<synchronous>, transform_indices = @transform_5, window_bounds = array<i64: 64, 128>}, {pipeline_mode = #tpu.pipeline_mode<synchronous>, transform_indices = @transform_6, window_bounds = array<i64: 32, 128>}, {pipeline_mode = #tpu.pipeline_mode<synchronous>, transform_indices = @transform_7, window_bounds = array<i64: 1, 128>}, {pipeline_mode = #tpu.pipeline_mode<synchronous>, transform_indices = @transform_8, window_bounds = array<i64: 32, 16>}, {pipeline_mode = #tpu.pipeline_mode<synchronous>, transform_indices = @transform_9, window_bounds = array<i64: 1, 16>}, {transform_indices = @transform_10, window_bounds = array<i64: 64, 16>}, {pipeline_mode = #tpu.pipeline_mode<synchronous>, transform_indices = @transform_11, window_bounds = array<i64: 8, 32>}, {pipeline_mode = #tpu.pipeline_mode<synchronous>, transform_indices = @transform_12, window_bounds = array<i64: 8, 32>}]} {
    %c0_i32 = arith.constant 0 : i32
    %0 = arith.cmpi eq, %arg0, %c0_i32 : i32
    %1 = arith.extui %0 : i1 to i32
    %c0_i32_0 = arith.constant 0 : i32
    %2 = arith.cmpi ne, %1, %c0_i32_0 : i32
    scf.if %2 {
      %cst_80 = arith.constant 0.000000e+00 : f32
      %220 = vector.broadcast %cst_80 : f32 to vector<8x32xf32>
      %c0_81 = arith.constant 0 : index
      %c0_82 = arith.constant 0 : index
      %221 = vector.load %arg12[%c0_81, %c0_82] : memref<8x32xf32, #tpu.memory_space<vmem>>, vector<8x32xf32>
      tpu.vector_store %arg12[%c0_81, %c0_82], %220 {strides = array<i32>} : memref<8x32xf32, #tpu.memory_space<vmem>>, vector<8x32xf32>,
      %cst_83 = arith.constant 0.000000e+00 : f32
      %222 = vector.broadcast %cst_83 : f32 to vector<8x32xf32>
      %c0_84 = arith.constant 0 : index
      %c0_85 = arith.constant 0 : index
      %223 = vector.load %arg13[%c0_84, %c0_85] : memref<8x32xf32, #tpu.memory_space<vmem>>, vector<8x32xf32>
      tpu.vector_store %arg13[%c0_84, %c0_85], %222 {strides = array<i32>} : memref<8x32xf32, #tpu.memory_space<vmem>>, vector<8x32xf32>,
    } else {
    }
    %c0 = arith.constant 0 : index
    %c0_1 = arith.constant 0 : index
    %3 = vector.load %arg1[%c0, %c0_1] : memref<64x20xf32, #tpu.memory_space<vmem>>, vector<64x20xf32>
    %c0_2 = arith.constant 0 : index
    %c0_3 = arith.constant 0 : index
    %4 = vector.load %arg2[%c0_2, %c0_3] : memref<20x64xf32, #tpu.memory_space<vmem>>, vector<20x64xf32>
    %cst = arith.constant dense<0.000000e+00> : vector<64x64xf32>
    %5 = tpu.matmul %3, %4, %cst {dimension_numbers = #tpu.dot_dimension_numbers<[1], [0], [0], [1], [0, 0, 1, 1], [], []>} : vector<64x20xf32>, vector<20x64xf32>, vector<64x64xf32> -> vector<64x64xf32>
    %c0_4 = arith.constant 0 : index
    %c0_5 = arith.constant 0 : index
    %6 = vector.load %arg3[%c0_4, %c0_5] : memref<1x64xf32, #tpu.memory_space<vmem>>, vector<1x64xf32>
    %7 = vector.broadcast %6 : vector<1x64xf32> to vector<64x64xf32>
    %8 = arith.addf %5, %7 : vector<64x64xf32>
    %cst_6 = arith.constant 0.000000e+00 : f32
    %9 = vector.broadcast %cst_6 : f32 to vector<64x64xf32>
    %10 = arith.maximumf %8, %9 : vector<64x64xf32>
    %c0_7 = arith.constant 0 : index
    %c0_8 = arith.constant 0 : index
    %11 = vector.load %arg4[%c0_7, %c0_8] : memref<64x64xf32, #tpu.memory_space<vmem>>, vector<64x64xf32>
    %cst_9 = arith.constant dense<0.000000e+00> : vector<64x64xf32>
    %12 = tpu.matmul %10, %11, %cst_9 {dimension_numbers = #tpu.dot_dimension_numbers<[1], [0], [0], [1], [0, 0, 1, 1], [], []>} : vector<64x64xf32>, vector<64x64xf32>, vector<64x64xf32> -> vector<64x64xf32>
    %c0_10 = arith.constant 0 : index
    %c0_11 = arith.constant 0 : index
    %13 = vector.load %arg5[%c0_10, %c0_11] : memref<1x64xf32, #tpu.memory_space<vmem>>, vector<1x64xf32>
    %14 = vector.broadcast %13 : vector<1x64xf32> to vector<64x64xf32>
    %15 = arith.addf %12, %14 : vector<64x64xf32>
    %cst_12 = arith.constant 0.000000e+00 : f32
    %16 = vector.broadcast %cst_12 : f32 to vector<64x64xf32>
    %17 = arith.maximumf %15, %16 : vector<64x64xf32>
    %c0_13 = arith.constant 0 : index
    %c0_14 = arith.constant 0 : index
    %18 = vector.load %arg6[%c0_13, %c0_14] : memref<64x128xf32, #tpu.memory_space<vmem>>, vector<64x128xf32>
    %cst_15 = arith.constant dense<0.000000e+00> : vector<64x128xf32>
    %19 = tpu.matmul %17, %18, %cst_15 {dimension_numbers = #tpu.dot_dimension_numbers<[1], [0], [0], [1], [0, 0, 1, 1], [], []>} : vector<64x64xf32>, vector<64x128xf32>, vector<64x128xf32> -> vector<64x128xf32>
    %c0_16 = arith.constant 0 : index
    %c0_17 = arith.constant 0 : index
    %20 = vector.load %arg8[%c0_16, %c0_17] : memref<1x128xf32, #tpu.memory_space<vmem>>, vector<1x128xf32>
    %21 = vector.broadcast %20 : vector<1x128xf32> to vector<64x128xf32>
    %22 = arith.addf %19, %21 : vector<64x128xf32>
    %c0_18 = arith.constant 0 : index
    %c0_19 = arith.constant 0 : index
    %23 = vector.load %arg14[%c0_18, %c0_19] : memref<64x128xf32, #tpu.memory_space<vmem>>, vector<64x128xf32>
    tpu.vector_store %arg14[%c0_18, %c0_19], %22 {strides = array<i32>} : memref<64x128xf32, #tpu.memory_space<vmem>>, vector<64x128xf32>,
    %c0_20 = arith.constant 0 : index
    %c0_21 = arith.constant 0 : index
    %24 = vector.load %arg7[%c0_20, %c0_21] : memref<32x128xf32, #tpu.memory_space<vmem>>, vector<32x128xf32>
    %c0_22 = arith.constant 0 : index
    %c0_23 = arith.constant 0 : index
    %25 = vector.load %arg12[%c0_22, %c0_23] : memref<8x32xf32, #tpu.memory_space<vmem>>, vector<8x32xf32>
    %c0_24 = arith.constant 0 : index
    %c0_25 = arith.constant 0 : index
    %26 = vector.load %arg13[%c0_24, %c0_25] : memref<8x32xf32, #tpu.memory_space<vmem>>, vector<8x32xf32>
    %c0_i32_26 = arith.constant 0 : i32
    %c8_i32 = arith.constant 8 : i32
    %27 = arith.muli %c0_i32_26, %c8_i32 : i32
    %28 = tpu.assume_multiple %27, 8 : i32
    %29 = arith.index_cast %28 : i32 to index
    %c0_27 = arith.constant 0 : index
    %30 = vector.load %arg14[%29, %c0_27] : memref<64x128xf32, #tpu.memory_space<vmem>>, vector<8x128xf32>
    %cst_28 = arith.constant dense<0.000000e+00> : vector<8x128xf32>
    %31 = tpu.matmul %25, %24, %cst_28 {dimension_numbers = #tpu.dot_dimension_numbers<[1], [0], [0], [1], [0, 0, 1, 1], [], []>} : vector<8x32xf32>, vector<32x128xf32>, vector<8x128xf32> -> vector<8x128xf32>
    %32 = arith.addf %30, %31 : vector<8x128xf32>
    %33 = arith.negf %32 : vector<8x128xf32>
    %34 = math.exp %33 : vector<8x128xf32>
    %cst_29 = arith.constant 1.000000e+00 : f32
    %35 = vector.broadcast %cst_29 : f32 to vector<8x128xf32>
    %36 = arith.addf %35, %34 : vector<8x128xf32>
    %37 = arith.divf %35, %36 : vector<8x128xf32>
    %38 = math.tanh %32 : vector<8x128xf32>
    %39 = vector.extract_strided_slice %37 {offsets = [0, 0], sizes = [8, 32], strides = [1, 1]} : vector<8x128xf32> to vector<8x32xf32>
    %40 = vector.extract_strided_slice %37 {offsets = [0, 32], sizes = [8, 32], strides = [1, 1]} : vector<8x128xf32> to vector<8x32xf32>
    %41 = vector.extract_strided_slice %38 {offsets = [0, 64], sizes = [8, 32], strides = [1, 1]} : vector<8x128xf32> to vector<8x32xf32>
    %42 = vector.extract_strided_slice %37 {offsets = [0, 96], sizes = [8, 32], strides = [1, 1]} : vector<8x128xf32> to vector<8x32xf32>
    %43 = arith.mulf %40, %26 : vector<8x32xf32>
    %44 = arith.mulf %39, %41 : vector<8x32xf32>
    %45 = arith.addf %43, %44 : vector<8x32xf32>
    %46 = math.tanh %45 : vector<8x32xf32>
    %47 = arith.mulf %42, %46 : vector<8x32xf32>
    %48 = arith.index_cast %28 : i32 to index
    %c0_30 = arith.constant 0 : index
    %49 = vector.load %arg15[%48, %c0_30] : memref<64x32xf32, #tpu.memory_space<vmem>>, vector<8x32xf32>
    tpu.vector_store %arg15[%48, %c0_30], %47 {strides = array<i32>} : memref<64x32xf32, #tpu.memory_space<vmem>>, vector<8x32xf32>,
    %c1_i32 = arith.constant 1 : i32
    %c8_i32_31 = arith.constant 8 : i32
    %50 = arith.muli %c1_i32, %c8_i32_31 : i32
    %51 = tpu.assume_multiple %50, 8 : i32
    %52 = arith.index_cast %51 : i32 to index
    %c0_32 = arith.constant 0 : index
    %53 = vector.load %arg14[%52, %c0_32] : memref<64x128xf32, #tpu.memory_space<vmem>>, vector<8x128xf32>
    %cst_33 = arith.constant dense<0.000000e+00> : vector<8x128xf32>
    %54 = tpu.matmul %47, %24, %cst_33 {dimension_numbers = #tpu.dot_dimension_numbers<[1], [0], [0], [1], [0, 0, 1, 1], [], []>} : vector<8x32xf32>, vector<32x128xf32>, vector<8x128xf32> -> vector<8x128xf32>
    %55 = arith.addf %53, %54 : vector<8x128xf32>
    %56 = arith.negf %55 : vector<8x128xf32>
    %57 = math.exp %56 : vector<8x128xf32>
    %cst_34 = arith.constant 1.000000e+00 : f32
    %58 = vector.broadcast %cst_34 : f32 to vector<8x128xf32>
    %59 = arith.addf %58, %57 : vector<8x128xf32>
    %60 = arith.divf %58, %59 : vector<8x128xf32>
    %61 = math.tanh %55 : vector<8x128xf32>
    %62 = vector.extract_strided_slice %60 {offsets = [0, 0], sizes = [8, 32], strides = [1, 1]} : vector<8x128xf32> to vector<8x32xf32>
    %63 = vector.extract_strided_slice %60 {offsets = [0, 32], sizes = [8, 32], strides = [1, 1]} : vector<8x128xf32> to vector<8x32xf32>
    %64 = vector.extract_strided_slice %61 {offsets = [0, 64], sizes = [8, 32], strides = [1, 1]} : vector<8x128xf32> to vector<8x32xf32>
    %65 = vector.extract_strided_slice %60 {offsets = [0, 96], sizes = [8, 32], strides = [1, 1]} : vector<8x128xf32> to vector<8x32xf32>
    %66 = arith.mulf %63, %45 : vector<8x32xf32>
    %67 = arith.mulf %62, %64 : vector<8x32xf32>
    %68 = arith.addf %66, %67 : vector<8x32xf32>
    %69 = math.tanh %68 : vector<8x32xf32>
    %70 = arith.mulf %65, %69 : vector<8x32xf32>
    %71 = arith.index_cast %51 : i32 to index
    %c0_35 = arith.constant 0 : index
    %72 = vector.load %arg15[%71, %c0_35] : memref<64x32xf32, #tpu.memory_space<vmem>>, vector<8x32xf32>
    tpu.vector_store %arg15[%71, %c0_35], %70 {strides = array<i32>} : memref<64x32xf32, #tpu.memory_space<vmem>>, vector<8x32xf32>,
    %c2_i32 = arith.constant 2 : i32
    %c8_i32_36 = arith.constant 8 : i32
    %73 = arith.muli %c2_i32, %c8_i32_36 : i32
    %74 = tpu.assume_multiple %73, 8 : i32
    %75 = arith.index_cast %74 : i32 to index
    %c0_37 = arith.constant 0 : index
    %76 = vector.load %arg14[%75, %c0_37] : memref<64x128xf32, #tpu.memory_space<vmem>>, vector<8x128xf32>
    %cst_38 = arith.constant dense<0.000000e+00> : vector<8x128xf32>
    %77 = tpu.matmul %70, %24, %cst_38 {dimension_numbers = #tpu.dot_dimension_numbers<[1], [0], [0], [1], [0, 0, 1, 1], [], []>} : vector<8x32xf32>, vector<32x128xf32>, vector<8x128xf32> -> vector<8x128xf32>
    %78 = arith.addf %76, %77 : vector<8x128xf32>
    %79 = arith.negf %78 : vector<8x128xf32>
    %80 = math.exp %79 : vector<8x128xf32>
    %cst_39 = arith.constant 1.000000e+00 : f32
    %81 = vector.broadcast %cst_39 : f32 to vector<8x128xf32>
    %82 = arith.addf %81, %80 : vector<8x128xf32>
    %83 = arith.divf %81, %82 : vector<8x128xf32>
    %84 = math.tanh %78 : vector<8x128xf32>
    %85 = vector.extract_strided_slice %83 {offsets = [0, 0], sizes = [8, 32], strides = [1, 1]} : vector<8x128xf32> to vector<8x32xf32>
    %86 = vector.extract_strided_slice %83 {offsets = [0, 32], sizes = [8, 32], strides = [1, 1]} : vector<8x128xf32> to vector<8x32xf32>
    %87 = vector.extract_strided_slice %84 {offsets = [0, 64], sizes = [8, 32], strides = [1, 1]} : vector<8x128xf32> to vector<8x32xf32>
    %88 = vector.extract_strided_slice %83 {offsets = [0, 96], sizes = [8, 32], strides = [1, 1]} : vector<8x128xf32> to vector<8x32xf32>
    %89 = arith.mulf %86, %68 : vector<8x32xf32>
    %90 = arith.mulf %85, %87 : vector<8x32xf32>
    %91 = arith.addf %89, %90 : vector<8x32xf32>
    %92 = math.tanh %91 : vector<8x32xf32>
    %93 = arith.mulf %88, %92 : vector<8x32xf32>
    %94 = arith.index_cast %74 : i32 to index
    %c0_40 = arith.constant 0 : index
    %95 = vector.load %arg15[%94, %c0_40] : memref<64x32xf32, #tpu.memory_space<vmem>>, vector<8x32xf32>
    tpu.vector_store %arg15[%94, %c0_40], %93 {strides = array<i32>} : memref<64x32xf32, #tpu.memory_space<vmem>>, vector<8x32xf32>,
    %c3_i32 = arith.constant 3 : i32
    %c8_i32_41 = arith.constant 8 : i32
    %96 = arith.muli %c3_i32, %c8_i32_41 : i32
    %97 = tpu.assume_multiple %96, 8 : i32
    %98 = arith.index_cast %97 : i32 to index
    %c0_42 = arith.constant 0 : index
    %99 = vector.load %arg14[%98, %c0_42] : memref<64x128xf32, #tpu.memory_space<vmem>>, vector<8x128xf32>
    %cst_43 = arith.constant dense<0.000000e+00> : vector<8x128xf32>
    %100 = tpu.matmul %93, %24, %cst_43 {dimension_numbers = #tpu.dot_dimension_numbers<[1], [0], [0], [1], [0, 0, 1, 1], [], []>} : vector<8x32xf32>, vector<32x128xf32>, vector<8x128xf32> -> vector<8x128xf32>
    %101 = arith.addf %99, %100 : vector<8x128xf32>
    %102 = arith.negf %101 : vector<8x128xf32>
    %103 = math.exp %102 : vector<8x128xf32>
    %cst_44 = arith.constant 1.000000e+00 : f32
    %104 = vector.broadcast %cst_44 : f32 to vector<8x128xf32>
    %105 = arith.addf %104, %103 : vector<8x128xf32>
    %106 = arith.divf %104, %105 : vector<8x128xf32>
    %107 = math.tanh %101 : vector<8x128xf32>
    %108 = vector.extract_strided_slice %106 {offsets = [0, 0], sizes = [8, 32], strides = [1, 1]} : vector<8x128xf32> to vector<8x32xf32>
    %109 = vector.extract_strided_slice %106 {offsets = [0, 32], sizes = [8, 32], strides = [1, 1]} : vector<8x128xf32> to vector<8x32xf32>
    %110 = vector.extract_strided_slice %107 {offsets = [0, 64], sizes = [8, 32], strides = [1, 1]} : vector<8x128xf32> to vector<8x32xf32>
    %111 = vector.extract_strided_slice %106 {offsets = [0, 96], sizes = [8, 32], strides = [1, 1]} : vector<8x128xf32> to vector<8x32xf32>
    %112 = arith.mulf %109, %91 : vector<8x32xf32>
    %113 = arith.mulf %108, %110 : vector<8x32xf32>
    %114 = arith.addf %112, %113 : vector<8x32xf32>
    %115 = math.tanh %114 : vector<8x32xf32>
    %116 = arith.mulf %111, %115 : vector<8x32xf32>
    %117 = arith.index_cast %97 : i32 to index
    %c0_45 = arith.constant 0 : index
    %118 = vector.load %arg15[%117, %c0_45] : memref<64x32xf32, #tpu.memory_space<vmem>>, vector<8x32xf32>
    tpu.vector_store %arg15[%117, %c0_45], %116 {strides = array<i32>} : memref<64x32xf32, #tpu.memory_space<vmem>>, vector<8x32xf32>,
    %c4_i32 = arith.constant 4 : i32
    %c8_i32_46 = arith.constant 8 : i32
    %119 = arith.muli %c4_i32, %c8_i32_46 : i32
    %120 = tpu.assume_multiple %119, 8 : i32
    %121 = arith.index_cast %120 : i32 to index
    %c0_47 = arith.constant 0 : index
    %122 = vector.load %arg14[%121, %c0_47] : memref<64x128xf32, #tpu.memory_space<vmem>>, vector<8x128xf32>
    %cst_48 = arith.constant dense<0.000000e+00> : vector<8x128xf32>
    %123 = tpu.matmul %116, %24, %cst_48 {dimension_numbers = #tpu.dot_dimension_numbers<[1], [0], [0], [1], [0, 0, 1, 1], [], []>} : vector<8x32xf32>, vector<32x128xf32>, vector<8x128xf32> -> vector<8x128xf32>
    %124 = arith.addf %122, %123 : vector<8x128xf32>
    %125 = arith.negf %124 : vector<8x128xf32>
    %126 = math.exp %125 : vector<8x128xf32>
    %cst_49 = arith.constant 1.000000e+00 : f32
    %127 = vector.broadcast %cst_49 : f32 to vector<8x128xf32>
    %128 = arith.addf %127, %126 : vector<8x128xf32>
    %129 = arith.divf %127, %128 : vector<8x128xf32>
    %130 = math.tanh %124 : vector<8x128xf32>
    %131 = vector.extract_strided_slice %129 {offsets = [0, 0], sizes = [8, 32], strides = [1, 1]} : vector<8x128xf32> to vector<8x32xf32>
    %132 = vector.extract_strided_slice %129 {offsets = [0, 32], sizes = [8, 32], strides = [1, 1]} : vector<8x128xf32> to vector<8x32xf32>
    %133 = vector.extract_strided_slice %130 {offsets = [0, 64], sizes = [8, 32], strides = [1, 1]} : vector<8x128xf32> to vector<8x32xf32>
    %134 = vector.extract_strided_slice %129 {offsets = [0, 96], sizes = [8, 32], strides = [1, 1]} : vector<8x128xf32> to vector<8x32xf32>
    %135 = arith.mulf %132, %114 : vector<8x32xf32>
    %136 = arith.mulf %131, %133 : vector<8x32xf32>
    %137 = arith.addf %135, %136 : vector<8x32xf32>
    %138 = math.tanh %137 : vector<8x32xf32>
    %139 = arith.mulf %134, %138 : vector<8x32xf32>
    %140 = arith.index_cast %120 : i32 to index
    %c0_50 = arith.constant 0 : index
    %141 = vector.load %arg15[%140, %c0_50] : memref<64x32xf32, #tpu.memory_space<vmem>>, vector<8x32xf32>
    tpu.vector_store %arg15[%140, %c0_50], %139 {strides = array<i32>} : memref<64x32xf32, #tpu.memory_space<vmem>>, vector<8x32xf32>,
    %c5_i32 = arith.constant 5 : i32
    %c8_i32_51 = arith.constant 8 : i32
    %142 = arith.muli %c5_i32, %c8_i32_51 : i32
    %143 = tpu.assume_multiple %142, 8 : i32
    %144 = arith.index_cast %143 : i32 to index
    %c0_52 = arith.constant 0 : index
    %145 = vector.load %arg14[%144, %c0_52] : memref<64x128xf32, #tpu.memory_space<vmem>>, vector<8x128xf32>
    %cst_53 = arith.constant dense<0.000000e+00> : vector<8x128xf32>
    %146 = tpu.matmul %139, %24, %cst_53 {dimension_numbers = #tpu.dot_dimension_numbers<[1], [0], [0], [1], [0, 0, 1, 1], [], []>} : vector<8x32xf32>, vector<32x128xf32>, vector<8x128xf32> -> vector<8x128xf32>
    %147 = arith.addf %145, %146 : vector<8x128xf32>
    %148 = arith.negf %147 : vector<8x128xf32>
    %149 = math.exp %148 : vector<8x128xf32>
    %cst_54 = arith.constant 1.000000e+00 : f32
    %150 = vector.broadcast %cst_54 : f32 to vector<8x128xf32>
    %151 = arith.addf %150, %149 : vector<8x128xf32>
    %152 = arith.divf %150, %151 : vector<8x128xf32>
    %153 = math.tanh %147 : vector<8x128xf32>
    %154 = vector.extract_strided_slice %152 {offsets = [0, 0], sizes = [8, 32], strides = [1, 1]} : vector<8x128xf32> to vector<8x32xf32>
    %155 = vector.extract_strided_slice %152 {offsets = [0, 32], sizes = [8, 32], strides = [1, 1]} : vector<8x128xf32> to vector<8x32xf32>
    %156 = vector.extract_strided_slice %153 {offsets = [0, 64], sizes = [8, 32], strides = [1, 1]} : vector<8x128xf32> to vector<8x32xf32>
    %157 = vector.extract_strided_slice %152 {offsets = [0, 96], sizes = [8, 32], strides = [1, 1]} : vector<8x128xf32> to vector<8x32xf32>
    %158 = arith.mulf %155, %137 : vector<8x32xf32>
    %159 = arith.mulf %154, %156 : vector<8x32xf32>
    %160 = arith.addf %158, %159 : vector<8x32xf32>
    %161 = math.tanh %160 : vector<8x32xf32>
    %162 = arith.mulf %157, %161 : vector<8x32xf32>
    %163 = arith.index_cast %143 : i32 to index
    %c0_55 = arith.constant 0 : index
    %164 = vector.load %arg15[%163, %c0_55] : memref<64x32xf32, #tpu.memory_space<vmem>>, vector<8x32xf32>
    tpu.vector_store %arg15[%163, %c0_55], %162 {strides = array<i32>} : memref<64x32xf32, #tpu.memory_space<vmem>>, vector<8x32xf32>,
    %c6_i32 = arith.constant 6 : i32
    %c8_i32_56 = arith.constant 8 : i32
    %165 = arith.muli %c6_i32, %c8_i32_56 : i32
    %166 = tpu.assume_multiple %165, 8 : i32
    %167 = arith.index_cast %166 : i32 to index
    %c0_57 = arith.constant 0 : index
    %168 = vector.load %arg14[%167, %c0_57] : memref<64x128xf32, #tpu.memory_space<vmem>>, vector<8x128xf32>
    %cst_58 = arith.constant dense<0.000000e+00> : vector<8x128xf32>
    %169 = tpu.matmul %162, %24, %cst_58 {dimension_numbers = #tpu.dot_dimension_numbers<[1], [0], [0], [1], [0, 0, 1, 1], [], []>} : vector<8x32xf32>, vector<32x128xf32>, vector<8x128xf32> -> vector<8x128xf32>
    %170 = arith.addf %168, %169 : vector<8x128xf32>
    %171 = arith.negf %170 : vector<8x128xf32>
    %172 = math.exp %171 : vector<8x128xf32>
    %cst_59 = arith.constant 1.000000e+00 : f32
    %173 = vector.broadcast %cst_59 : f32 to vector<8x128xf32>
    %174 = arith.addf %173, %172 : vector<8x128xf32>
    %175 = arith.divf %173, %174 : vector<8x128xf32>
    %176 = math.tanh %170 : vector<8x128xf32>
    %177 = vector.extract_strided_slice %175 {offsets = [0, 0], sizes = [8, 32], strides = [1, 1]} : vector<8x128xf32> to vector<8x32xf32>
    %178 = vector.extract_strided_slice %175 {offsets = [0, 32], sizes = [8, 32], strides = [1, 1]} : vector<8x128xf32> to vector<8x32xf32>
    %179 = vector.extract_strided_slice %176 {offsets = [0, 64], sizes = [8, 32], strides = [1, 1]} : vector<8x128xf32> to vector<8x32xf32>
    %180 = vector.extract_strided_slice %175 {offsets = [0, 96], sizes = [8, 32], strides = [1, 1]} : vector<8x128xf32> to vector<8x32xf32>
    %181 = arith.mulf %178, %160 : vector<8x32xf32>
    %182 = arith.mulf %177, %179 : vector<8x32xf32>
    %183 = arith.addf %181, %182 : vector<8x32xf32>
    %184 = math.tanh %183 : vector<8x32xf32>
    %185 = arith.mulf %180, %184 : vector<8x32xf32>
    %186 = arith.index_cast %166 : i32 to index
    %c0_60 = arith.constant 0 : index
    %187 = vector.load %arg15[%186, %c0_60] : memref<64x32xf32, #tpu.memory_space<vmem>>, vector<8x32xf32>
    tpu.vector_store %arg15[%186, %c0_60], %185 {strides = array<i32>} : memref<64x32xf32, #tpu.memory_space<vmem>>, vector<8x32xf32>,
    %c7_i32 = arith.constant 7 : i32
    %c8_i32_61 = arith.constant 8 : i32
    %188 = arith.muli %c7_i32, %c8_i32_61 : i32
    %189 = tpu.assume_multiple %188, 8 : i32
    %190 = arith.index_cast %189 : i32 to index
    %c0_62 = arith.constant 0 : index
    %191 = vector.load %arg14[%190, %c0_62] : memref<64x128xf32, #tpu.memory_space<vmem>>, vector<8x128xf32>
    %cst_63 = arith.constant dense<0.000000e+00> : vector<8x128xf32>
    %192 = tpu.matmul %185, %24, %cst_63 {dimension_numbers = #tpu.dot_dimension_numbers<[1], [0], [0], [1], [0, 0, 1, 1], [], []>} : vector<8x32xf32>, vector<32x128xf32>, vector<8x128xf32> -> vector<8x128xf32>
    %193 = arith.addf %191, %192 : vector<8x128xf32>
    %194 = arith.negf %193 : vector<8x128xf32>
    %195 = math.exp %194 : vector<8x128xf32>
    %cst_64 = arith.constant 1.000000e+00 : f32
    %196 = vector.broadcast %cst_64 : f32 to vector<8x128xf32>
    %197 = arith.addf %196, %195 : vector<8x128xf32>
    %198 = arith.divf %196, %197 : vector<8x128xf32>
    %199 = math.tanh %193 : vector<8x128xf32>
    %200 = vector.extract_strided_slice %198 {offsets = [0, 0], sizes = [8, 32], strides = [1, 1]} : vector<8x128xf32> to vector<8x32xf32>
    %201 = vector.extract_strided_slice %198 {offsets = [0, 32], sizes = [8, 32], strides = [1, 1]} : vector<8x128xf32> to vector<8x32xf32>
    %202 = vector.extract_strided_slice %199 {offsets = [0, 64], sizes = [8, 32], strides = [1, 1]} : vector<8x128xf32> to vector<8x32xf32>
    %203 = vector.extract_strided_slice %198 {offsets = [0, 96], sizes = [8, 32], strides = [1, 1]} : vector<8x128xf32> to vector<8x32xf32>
    %204 = arith.mulf %201, %183 : vector<8x32xf32>
    %205 = arith.mulf %200, %202 : vector<8x32xf32>
    %206 = arith.addf %204, %205 : vector<8x32xf32>
    %207 = math.tanh %206 : vector<8x32xf32>
    %208 = arith.mulf %203, %207 : vector<8x32xf32>
    %209 = arith.index_cast %189 : i32 to index
    %c0_65 = arith.constant 0 : index
    %210 = vector.load %arg15[%209, %c0_65] : memref<64x32xf32, #tpu.memory_space<vmem>>, vector<8x32xf32>
    tpu.vector_store %arg15[%209, %c0_65], %208 {strides = array<i32>} : memref<64x32xf32, #tpu.memory_space<vmem>>, vector<8x32xf32>,
    %c8_i32_66 = arith.constant 8 : i32
    %c0_67 = arith.constant 0 : index
    %c0_68 = arith.constant 0 : index
    %211 = vector.load %arg12[%c0_67, %c0_68] : memref<8x32xf32, #tpu.memory_space<vmem>>, vector<8x32xf32>
    tpu.vector_store %arg12[%c0_67, %c0_68], %208 {strides = array<i32>} : memref<8x32xf32, #tpu.memory_space<vmem>>, vector<8x32xf32>,
    %c0_69 = arith.constant 0 : index
    %c0_70 = arith.constant 0 : index
    %212 = vector.load %arg13[%c0_69, %c0_70] : memref<8x32xf32, #tpu.memory_space<vmem>>, vector<8x32xf32>
    tpu.vector_store %arg13[%c0_69, %c0_70], %206 {strides = array<i32>} : memref<8x32xf32, #tpu.memory_space<vmem>>, vector<8x32xf32>,
    %c0_71 = arith.constant 0 : index
    %c0_72 = arith.constant 0 : index
    %213 = vector.load %arg15[%c0_71, %c0_72] : memref<64x32xf32, #tpu.memory_space<vmem>>, vector<64x32xf32>
    %c0_73 = arith.constant 0 : index
    %c0_74 = arith.constant 0 : index
    %214 = vector.load %arg9[%c0_73, %c0_74] : memref<32x16xf32, #tpu.memory_space<vmem>>, vector<32x16xf32>
    %cst_75 = arith.constant dense<0.000000e+00> : vector<64x16xf32>
    %215 = tpu.matmul %213, %214, %cst_75 {dimension_numbers = #tpu.dot_dimension_numbers<[1], [0], [0], [1], [0, 0, 1, 1], [], []>} : vector<64x32xf32>, vector<32x16xf32>, vector<64x16xf32> -> vector<64x16xf32>
    %c0_76 = arith.constant 0 : index
    %c0_77 = arith.constant 0 : index
    %216 = vector.load %arg10[%c0_76, %c0_77] : memref<1x16xf32, #tpu.memory_space<vmem>>, vector<1x16xf32>
    %217 = vector.broadcast %216 : vector<1x16xf32> to vector<64x16xf32>
    %218 = arith.addf %215, %217 : vector<64x16xf32>
    %c0_78 = arith.constant 0 : index
    %c0_79 = arith.constant 0 : index
    %219 = vector.load %arg11[%c0_78, %c0_79] : memref<64x16xf32, #tpu.memory_space<vmem>>, vector<64x16xf32>
    tpu.vector_store %arg11[%c0_78, %c0_79], %218 {strides = array<i32>} : memref<64x16xf32, #tpu.memory_space<vmem>>, vector<64x16xf32>,
    return
  }
  func.func @transform_0(%arg0: i32) -> (i32, i32) {
    %c0_i32 = arith.constant 0 : i32
    %c0_i32_0 = arith.constant 0 : i32
    return %arg0, %c0_i32 : i32, i32
  }
  func.func @transform_1(%arg0: i32) -> (i32, i32) {
    %c0_i32 = arith.constant 0 : i32
    %c0_i32_0 = arith.constant 0 : i32
    %c0_i32_1 = arith.constant 0 : i32
    return %c0_i32, %c0_i32_0 : i32, i32
  }
  func.func @transform_2(%arg0: i32) -> (i32, i32) {
    %c0_i32 = arith.constant 0 : i32
    %c0_i32_0 = arith.constant 0 : i32
    %c0_i32_1 = arith.constant 0 : i32
    return %c0_i32, %c0_i32_0 : i32, i32
  }
  func.func @transform_3(%arg0: i32) -> (i32, i32) {
    %c0_i32 = arith.constant 0 : i32
    %c0_i32_0 = arith.constant 0 : i32
    %c0_i32_1 = arith.constant 0 : i32
    return %c0_i32, %c0_i32_0 : i32, i32
  }
  func.func @transform_4(%arg0: i32) -> (i32, i32) {
    %c0_i32 = arith.constant 0 : i32
    %c0_i32_0 = arith.constant 0 : i32
    %c0_i32_1 = arith.constant 0 : i32
    return %c0_i32, %c0_i32_0 : i32, i32
  }
  func.func @transform_5(%arg0: i32) -> (i32, i32) {
    %c0_i32 = arith.constant 0 : i32
    %c0_i32_0 = arith.constant 0 : i32
    %c0_i32_1 = arith.constant 0 : i32
    return %c0_i32, %c0_i32_0 : i32, i32
  }
  func.func @transform_6(%arg0: i32) -> (i32, i32) {
    %c0_i32 = arith.constant 0 : i32
    %c0_i32_0 = arith.constant 0 : i32
    %c0_i32_1 = arith.constant 0 : i32
    return %c0_i32, %c0_i32_0 : i32, i32
  }
  func.func @transform_7(%arg0: i32) -> (i32, i32) {
    %c0_i32 = arith.constant 0 : i32
    %c0_i32_0 = arith.constant 0 : i32
    %c0_i32_1 = arith.constant 0 : i32
    return %c0_i32, %c0_i32_0 : i32, i32
  }
  func.func @transform_8(%arg0: i32) -> (i32, i32) {
    %c0_i32 = arith.constant 0 : i32
    %c0_i32_0 = arith.constant 0 : i32
    %c0_i32_1 = arith.constant 0 : i32
    return %c0_i32, %c0_i32_0 : i32, i32
  }
  func.func @transform_9(%arg0: i32) -> (i32, i32) {
    %c0_i32 = arith.constant 0 : i32
    %c0_i32_0 = arith.constant 0 : i32
    %c0_i32_1 = arith.constant 0 : i32
    return %c0_i32, %c0_i32_0 : i32, i32
  }
  func.func @transform_10(%arg0: i32) -> (i32, i32) {
    %c0_i32 = arith.constant 0 : i32
    %c0_i32_0 = arith.constant 0 : i32
    return %arg0, %c0_i32 : i32, i32
  }
  func.func @transform_11(%arg0: i32) -> (i32, i32) {
    %c0_i32 = arith.constant 0 : i32
    %c0_i32_0 = arith.constant 0 : i32
    %c0_i32_1 = arith.constant 0 : i32
    return %c0_i32, %c0_i32_0 : i32, i32
  }
  func.func @transform_12(%arg0: i32) -> (i32, i32) {
    %c0_i32 = arith.constant 0 : i32
    %c0_i32_0 = arith.constant 0 : i32
    %c0_i32_1 = arith.constant 0 : i32
    return %c0_i32, %c0_i32_0 : i32, i32
  }
}

</mosaic_0001>

<llo_original>
// kernel: tpu_custom_call.1
$region0: #{tpu_custom_call.1}
  #allocation0 [shape = 'u32[]', space=smem, size = 0x4, offset = 0x4, fixed_abs, tag = 'smem constant byte address 0x4 - core index']
  #allocation1 [shape = 'u32[72,128]{1,0:T(1,128)}', space=vmem, size = 0x9000, scoped, tag = 'internal scratch']
  #allocation2 [shape = 'f32[64,128]{1,0:T(8,128)}', space=vmem, size = 0x8000, scoped, tag = 'scratch operand']
  #allocation3 [shape = 'f32[64,32]{1,0:T(8,128)}', space=vmem, size = 0x8000, scoped, tag = 'scratch operand']
  %s0 = inlined_call_operand.vmem [shape: f32[64,20], index: 0, kind: input, shape index: {}]
  %s1 = inlined_call_operand.hbm [shape: f32[20,64], index: 1, kind: input, shape index: {}]
  %s2 = inlined_call_operand.vmem [shape: f32[1,64], index: 2, kind: input, shape index: {}]
  %s3 = inlined_call_operand.vmem [shape: f32[64,64], index: 3, kind: input, shape index: {}]
  %s4 = inlined_call_operand.vmem [shape: f32[1,64], index: 4, kind: input, shape index: {}]
  %s5 = inlined_call_operand.hbm [shape: f32[64,128], index: 5, kind: input, shape index: {}]
  %s6 = inlined_call_operand.vmem [shape: f32[32,128], index: 6, kind: input, shape index: {}]
  %s7 = inlined_call_operand.vmem [shape: f32[1,128], index: 7, kind: input, shape index: {}]
  %s8 = inlined_call_operand.vmem [shape: f32[32,16], index: 8, kind: input, shape index: {}]
  %s9 = inlined_call_operand.vmem [shape: f32[1,16], index: 9, kind: input, shape index: {}]
  %s10 = inlined_call_operand.vmem [shape: f32[64,16], index: 10, kind: output, shape index: {0}]
  %s11 = inlined_call_operand.hbm [shape: f32[8,32], index: 11, kind: output, shape index: {1}]
  %s12 = inlined_call_operand.hbm [shape: f32[8,32], index: 12, kind: output, shape index: {2}]
  %13 = xla_tuple %s10, %s11, %s12
  %s14 = sld [smem:[#allocation0]]
  $region78: #{tpu_custom_call.1} parent=0
    _
  %s16 = ssub.s32 1, %s14
  %s17 = scalar_select 0, %s16, %s14
  $region1: #{tpu_custom_call.1} parent=0
    #allocation4 [shape = 'u8[12288]{0}', space=vmem, size = 0x3000, scoped, tag = 'input window, operand 1, single buffered']
    #allocation5 [shape = 's32[1]{0}', space=sflag, size = 0x4, scoped, tag = 'scoped memory for tpu_custom_call.1']
    #allocation6 [shape = 's32[1]{0}', space=sflag, size = 0x4, scoped, tag = 'scoped memory for tpu_custom_call.1']
    #allocation7 [shape = 'u8[32768]{0}', space=vmem, size = 0x8000, scoped, tag = 'input window, operand 5, single buffered']
    #allocation8 [shape = 's32[1]{0}', space=sflag, size = 0x4, scoped, tag = 'scoped memory for tpu_custom_call.1']
    #allocation9 [shape = 'u8[4096]{0}', space=vmem, size = 0x1000, scoped, tag = 'output window, operand 1, single buffered']
    #allocation10 [shape = 'u8[4096]{0}', space=vmem, size = 0x1000, scoped, tag = 'output window, operand 2, single buffered']
    #allocation11 [shape = 's32[1]{0}', space=sflag, size = 0x4, scoped, tag = 'scoped memory for tpu_custom_call.1']
    %18 = vsyncpa [#allocation5], 0
    %19 = vsyncpa [#allocation8], 0
    %20 = vsyncpa [#allocation6], 0
    %21 = vsyncpa [#allocation11], 0
    // Predicated region
    $region2: #{tpu_custom_call.1} parent=1 // pred_check
      _
    $region3: #{tpu_custom_call.1} parent=1 // pred_check_branch
      %23 = sbr.rel (0) target = $region5
    $region4: #{tpu_custom_call.1} parent=1 // pred_region
      _
    $region5: #{tpu_custom_call.1} parent=1 // pred_fallthru
      _
    // Predicated region
    $region6: #{tpu_custom_call.1} parent=1 // pred_check
      _
    $region7: #{tpu_custom_call.1} parent=1 // pred_check_branch
      %25 = sbr.rel (0) target = $region9
    $region8: #{tpu_custom_call.1} parent=1 // pred_region
      %27 = vsyncadd [#allocation5], 0
      %s28 = sshll.u32 %s1, 4
      %s29 = int_to_ptr.hbm [resolvable:$true] %s28
      %s30 = sshll.u32 [#allocation4], 4
      %s31 = int_to_ptr.vmem [resolvable:$true] %s30
      %36 = dma.hbm_to_vmem [thread:$0]  %s29, 384, %s31, [#allocation5], 128, 128, 8
    $region9: #{tpu_custom_call.1} parent=1 // pred_fallthru
      _
    // Predicated region
    $region10: #{tpu_custom_call.1} parent=1 // pred_check
      _
    $region11: #{tpu_custom_call.1} parent=1 // pred_check_branch
      %38 = sbr.rel (0) target = $region13
    $region12: #{tpu_custom_call.1} parent=1 // pred_region
      _
    $region13: #{tpu_custom_call.1} parent=1 // pred_fallthru
      _
    // Predicated region
    $region14: #{tpu_custom_call.1} parent=1 // pred_check
      _
    $region15: #{tpu_custom_call.1} parent=1 // pred_check_branch
      %40 = sbr.rel (0) target = $region17
    $region16: #{tpu_custom_call.1} parent=1 // pred_region
      _
    $region17: #{tpu_custom_call.1} parent=1 // pred_fallthru
      _
    // Predicated region
    $region18: #{tpu_custom_call.1} parent=1 // pred_check
      _
    $region19: #{tpu_custom_call.1} parent=1 // pred_check_branch
      %42 = sbr.rel (0) target = $region21
    $region20: #{tpu_custom_call.1} parent=1 // pred_region
      _
    $region21: #{tpu_custom_call.1} parent=1 // pred_fallthru
      _
    // Predicated region
    $region22: #{tpu_custom_call.1} parent=1 // pred_check
      _
    $region23: #{tpu_custom_call.1} parent=1 // pred_check_branch
      %44 = sbr.rel (0) target = $region25
    $region24: #{tpu_custom_call.1} parent=1 // pred_region
      %46 = vsyncadd [#allocation8], 0
      %s47 = sshll.u32 %s5, 4
      %s48 = int_to_ptr.hbm [resolvable:$true] %s47
      %s49 = sshll.u32 [#allocation7], 4
      %s50 = int_to_ptr.vmem [resolvable:$true] %s49
      %55 = dma.hbm_to_vmem [thread:$0]  %s48, 1024, %s50, [#allocation8], 128, 128, 8
    $region25: #{tpu_custom_call.1} parent=1 // pred_fallthru
      _
    // Predicated region
    $region26: #{tpu_custom_call.1} parent=1 // pred_check
      _
    $region27: #{tpu_custom_call.1} parent=1 // pred_check_branch
      %57 = sbr.rel (0) target = $region29
    $region28: #{tpu_custom_call.1} parent=1 // pred_region
      _
    $region29: #{tpu_custom_call.1} parent=1 // pred_fallthru
      _
    // Predicated region
    $region30: #{tpu_custom_call.1} parent=1 // pred_check
      _
    $region31: #{tpu_custom_call.1} parent=1 // pred_check_branch
      %59 = sbr.rel (0) target = $region33
    $region32: #{tpu_custom_call.1} parent=1 // pred_region
      _
    $region33: #{tpu_custom_call.1} parent=1 // pred_fallthru
      _
    // Predicated region
    $region34: #{tpu_custom_call.1} parent=1 // pred_check
      _
    $region35: #{tpu_custom_call.1} parent=1 // pred_check_branch
      %61 = sbr.rel (0) target = $region37
    $region36: #{tpu_custom_call.1} parent=1 // pred_region
      _
    $region37: #{tpu_custom_call.1} parent=1 // pred_fallthru
      _
    // Predicated region
    $region38: #{tpu_custom_call.1} parent=1 // pred_check
      _
    $region39: #{tpu_custom_call.1} parent=1 // pred_check_branch
      %63 = sbr.rel (0) target = $region41
    $region40: #{tpu_custom_call.1} parent=1 // pred_region
      _
    $region41: #{tpu_custom_call.1} parent=1 // pred_fallthru
      _
    // Predicated region
    $region42: #{tpu_custom_call.1} parent=1 // pred_check
      _
    $region43: #{tpu_custom_call.1} parent=1 // pred_check_branch
      %65 = sbr.rel (0) target = $region45
    $region44: #{tpu_custom_call.1} parent=1 // pred_region
      %67 = dma.done [#allocation5], 384
    $region45: #{tpu_custom_call.1} parent=1 // pred_fallthru
      _
    // Predicated region
    $region46: #{tpu_custom_call.1} parent=1 // pred_check
      _
    $region47: #{tpu_custom_call.1} parent=1 // pred_check_branch
      %69 = sbr.rel (0) target = $region49
    $region48: #{tpu_custom_call.1} parent=1 // pred_region
      %71 = dma.done [#allocation8], 1024
    $region49: #{tpu_custom_call.1} parent=1 // pred_fallthru
      _
    %p72 = scmp.eq.s32.totalorder 0, 0
    // Predicated region
    $region50: #{tpu_custom_call.1} parent=1 // pred_check
      %p73 = pneg %p72
    $region51: #{tpu_custom_call.1} parent=1 // pred_check_branch
      %75 = sbr.rel (%p73) target = $region53
    $region52: #{tpu_custom_call.1} parent=1 // pred_region
      %vm76 = vcmask 261120
      %77 = vst.msk [vmem:[#allocation9] sm:$0xff] %vm76, 0.0
      %78 = vst.msk [vmem:[#allocation10] sm:$0xff] %vm76, 0.0
    $region53: #{tpu_custom_call.1} parent=1 // pred_fallthru
      _
    %v79 = vld [vmem:[%s0] sm:$0xff]
    %v80 = vld [vmem:[%s0 + $0x8] sm:$0xff]
    %v81 = vld [vmem:[%s0 + $0x10] sm:$0xff]
    %v82 = vld [vmem:[%s0 + $0x18] sm:$0xff]
    %v83 = vld [vmem:[%s0 + $0x20] sm:$0xff]
    %v84 = vld [vmem:[%s0 + $0x28] sm:$0xff]
    %v85 = vld [vmem:[%s0 + $0x30] sm:$0xff]
    %v86 = vld [vmem:[%s0 + $0x38] sm:$0xff]
    %v87 = vld [vmem:[#allocation4] sm:$0xff]
    %v88 = vld [vmem:[#allocation4 + $0x8] sm:$0xff]
    %v89 = vld [vmem:[#allocation4 + $0x10] sm:$0xf]
    %v90 = vld [vmem:[%s2] sm:$0x1]
    %v92 = vperm.slane %v90, 0
    %vm94 = vcmask 162816
    %v96 = vsel %vm94, %v79, 0
    %v99 = vsel %vm94, %v80, 0
    %v102 = vsel %vm94, %v81, 0
    %v105 = vsel %vm94, %v82, 0
    %v108 = vsel %vm94, %v83, 0
    %v111 = vsel %vm94, %v84, 0
    %v114 = vsel %vm94, %v85, 0
    %v117 = vsel %vm94, %v86, 0
    %vm119 = vcmask 1043456
    %v121 = vsel %vm119, %v89, 0
    %123 = vmatpush.msra.mxu0 0.0
    %124 = vmatpush.msra.mxu0 0.0
    %125 = vmatpush.msra.mxu0 0.0
    %126 = vmatpush.msra.mxu0 0.0
    %127 = vmatpush.msra.mxu0 0.0
    %128 = vmatpush.msra.mxu0 0.0
    %129 = vmatpush.msra.mxu0 0.0
    %130 = vmatpush.msra.mxu0 0.0
    %131 = vmatpush.msra.mxu0 0.0
    %132 = vmatpush.msra.mxu0 0.0
    %133 = vmatpush.msra.mxu0 0.0
    %134 = vmatpush.msra.mxu0 0.0
    %135 = vmatpush.msra.mxu0 0.0
    %136 = vmatpush.msra.mxu0 %v121
    %137 = vmatpush.msra.mxu0 %v88
    %138 = vmatpush.msra.mxu0 %v87
    %139 = vmatmul.f32.gmra.mxu0 %v96
    %v140 = vpop.f32.mrf.mxu0
    %v141 = vadd.f32 %v92, %v140
    %142 = vmatmul.f32.gmra.mxu0 %v99
    %v143 = vpop.f32.mrf.mxu0
    %v144 = vadd.f32 %v92, %v143
    %145 = vmatmul.f32.gmra.mxu0 %v102
    %v146 = vpop.f32.mrf.mxu0
    %v147 = vadd.f32 %v92, %v146
    %148 = vmatmul.f32.gmra.mxu0 %v105
    %v149 = vpop.f32.mrf.mxu0
    %v150 = vadd.f32 %v92, %v149
    %151 = vmatmul.f32.gmra.mxu0 %v108
    %v152 = vpop.f32.mrf.mxu0
    %v153 = vadd.f32 %v92, %v152
    %154 = vmatmul.f32.gmra.mxu0 %v111
    %v155 = vpop.f32.mrf.mxu0
    %v156 = vadd.f32 %v92, %v155
    %157 = vmatmul.f32.gmra.mxu0 %v114
    %v158 = vpop.f32.mrf.mxu0
    %v159 = vadd.f32 %v92, %v158
    %160 = vmatmul.f32.gmra.mxu0 %v117
    %v161 = vpop.f32.mrf.mxu0
    %v162 = vadd.f32 %v92, %v161
    %163 = vdwg.mxu0
    %v164 = vmax.f32 %v141, 0.0
    %v165 = vmax.f32 %v144, 0.0
    %v166 = vmax.f32 %v147, 0.0
    %v167 = vmax.f32 %v150, 0.0
    %v168 = vmax.f32 %v153, 0.0
    %v169 = vmax.f32 %v156, 0.0
    %v170 = vmax.f32 %v159, 0.0
    %v171 = vmax.f32 %v162, 0.0
    %v172 = vld [vmem:[%s3] sm:$0xff]
    %v173 = vld [vmem:[%s3 + $0x8] sm:$0xff]
    %v174 = vld [vmem:[%s3 + $0x10] sm:$0xff]
    %v175 = vld [vmem:[%s3 + $0x18] sm:$0xff]
    %v176 = vld [vmem:[%s3 + $0x20] sm:$0xff]
    %v177 = vld [vmem:[%s3 + $0x28] sm:$0xff]
    %v178 = vld [vmem:[%s3 + $0x30] sm:$0xff]
    %v179 = vld [vmem:[%s3 + $0x38] sm:$0xff]
    %v180 = vld [vmem:[%s4] sm:$0x1]
    %v182 = vperm.slane %v180, 0
    %vm184 = vcmask 523264
    %v186 = vsel %vm184, %v164, 0
    %v189 = vsel %vm184, %v165, 0
    %v192 = vsel %vm184, %v166, 0
    %v195 = vsel %vm184, %v167, 0
    %v198 = vsel %vm184, %v168, 0
    %v201 = vsel %vm184, %v169, 0
    %v204 = vsel %vm184, %v170, 0
    %v207 = vsel %vm184, %v171, 0
    %209 = vmatpush.msra.mxu0 0.0
    %210 = vmatpush.msra.mxu0 0.0
    %211 = vmatpush.msra.mxu0 0.0
    %212 = vmatpush.msra.mxu0 0.0
    %213 = vmatpush.msra.mxu0 0.0
    %214 = vmatpush.msra.mxu0 0.0
    %215 = vmatpush.msra.mxu0 0.0
    %216 = vmatpush.msra.mxu0 0.0
    %217 = vmatpush.msra.mxu0 %v179
    %218 = vmatpush.msra.mxu0 %v178
    %219 = vmatpush.msra.mxu0 %v177
    %220 = vmatpush.msra.mxu0 %v176
    %221 = vmatpush.msra.mxu0 %v175
    %222 = vmatpush.msra.mxu0 %v174
    %223 = vmatpush.msra.mxu0 %v173
    %224 = vmatpush.msra.mxu0 %v172
    %225 = vmatmul.f32.gmra.mxu0 %v186
    %v226 = vpop.f32.mrf.mxu0
    %v227 = vadd.f32 %v182, %v226
    %228 = vmatmul.f32.gmra.mxu0 %v189
    %v229 = vpop.f32.mrf.mxu0
    %v230 = vadd.f32 %v182, %v229
    %231 = vmatmul.f32.gmra.mxu0 %v192
    %v232 = vpop.f32.mrf.mxu0
    %v233 = vadd.f32 %v182, %v232
    %234 = vmatmul.f32.gmra.mxu0 %v195
    %v235 = vpop.f32.mrf.mxu0
    %v236 = vadd.f32 %v182, %v235
    %237 = vmatmul.f32.gmra.mxu0 %v198
    %v238 = vpop.f32.mrf.mxu0
    %v239 = vadd.f32 %v182, %v238
    %240 = vmatmul.f32.gmra.mxu0 %v201
    %v241 = vpop.f32.mrf.mxu0
    %v242 = vadd.f32 %v182, %v241
    %243 = vmatmul.f32.gmra.mxu0 %v204
    %v244 = vpop.f32.mrf.mxu0
    %v245 = vadd.f32 %v182, %v244
    %246 = vmatmul.f32.gmra.mxu0 %v207
    %v247 = vpop.f32.mrf.mxu0
    %v248 = vadd.f32 %v182, %v247
    %249 = vdwg.mxu0
    %v250 = vmax.f32 %v227, 0.0
    %v251 = vmax.f32 %v230, 0.0
    %v252 = vmax.f32 %v233, 0.0
    %v253 = vmax.f32 %v236, 0.0
    %v254 = vmax.f32 %v239, 0.0
    %v255 = vmax.f32 %v242, 0.0
    %v256 = vmax.f32 %v245, 0.0
    %v257 = vmax.f32 %v248, 0.0
    %v258 = vld [vmem:[#allocation7] sm:$0xff]
    %v259 = vld [vmem:[#allocation7 + $0x8] sm:$0xff]
    %v260 = vld [vmem:[#allocation7 + $0x10] sm:$0xff]
    %v261 = vld [vmem:[#allocation7 + $0x18] sm:$0xff]
    %v262 = vld [vmem:[#allocation7 + $0x20] sm:$0xff]
    %v263 = vld [vmem:[#allocation7 + $0x28] sm:$0xff]
    %v264 = vld [vmem:[#allocation7 + $0x30] sm:$0xff]
    %v265 = vld [vmem:[#allocation7 + $0x38] sm:$0xff]
    %v266 = vld [vmem:[%s7] sm:$0x1]
    %v268 = vperm.slane %v266, 0
    %v271 = vsel %vm184, %v250, 0
    %v274 = vsel %vm184, %v251, 0
    %v277 = vsel %vm184, %v252, 0
    %v280 = vsel %vm184, %v253, 0
    %v283 = vsel %vm184, %v254, 0
    %v286 = vsel %vm184, %v255, 0
    %v289 = vsel %vm184, %v256, 0
    %v292 = vsel %vm184, %v257, 0
    %294 = vmatpush.msra.mxu0 0.0
    %295 = vmatpush.msra.mxu0 0.0
    %296 = vmatpush.msra.mxu0 0.0
    %297 = vmatpush.msra.mxu0 0.0
    %298 = vmatpush.msra.mxu0 0.0
    %299 = vmatpush.msra.mxu0 0.0
    %300 = vmatpush.msra.mxu0 0.0
    %301 = vmatpush.msra.mxu0 0.0
    %302 = vmatpush.msra.mxu0 %v265
    %303 = vmatpush.msra.mxu0 %v264
    %304 = vmatpush.msra.mxu0 %v263
    %305 = vmatpush.msra.mxu0 %v262
    %306 = vmatpush.msra.mxu0 %v261
    %307 = vmatpush.msra.mxu0 %v260
    %308 = vmatpush.msra.mxu0 %v259
    %309 = vmatpush.msra.mxu0 %v258
    %310 = vmatmul.f32.gmra.mxu0 %v271
    %v311 = vpop.f32.mrf.mxu0
    %v312 = vadd.f32 %v268, %v311
    %313 = vmatmul.f32.gmra.mxu0 %v274
    %v314 = vpop.f32.mrf.mxu0
    %v315 = vadd.f32 %v268, %v314
    %316 = vmatmul.f32.gmra.mxu0 %v277
    %v317 = vpop.f32.mrf.mxu0
    %v318 = vadd.f32 %v268, %v317
    %319 = vmatmul.f32.gmra.mxu0 %v280
    %v320 = vpop.f32.mrf.mxu0
    %v321 = vadd.f32 %v268, %v320
    %322 = vmatmul.f32.gmra.mxu0 %v283
    %v323 = vpop.f32.mrf.mxu0
    %v324 = vadd.f32 %v268, %v323
    %325 = vmatmul.f32.gmra.mxu0 %v286
    %v326 = vpop.f32.mrf.mxu0
    %v327 = vadd.f32 %v268, %v326
    %328 = vmatmul.f32.gmra.mxu0 %v289
    %v329 = vpop.f32.mrf.mxu0
    %v330 = vadd.f32 %v268, %v329
    %331 = vmatmul.f32.gmra.mxu0 %v292
    %v332 = vpop.f32.mrf.mxu0
    %v333 = vadd.f32 %v268, %v332
    %334 = vdwg.mxu0
    %335 = vst [vmem:[#allocation2] sm:$0xff] %v312
    %336 = vst [vmem:[#allocation2 + $0x8] sm:$0xff] %v315
    %337 = vst [vmem:[#allocation2 + $0x10] sm:$0xff] %v318
    %338 = vst [vmem:[#allocation2 + $0x18] sm:$0xff] %v321
    %339 = vst [vmem:[#allocation2 + $0x20] sm:$0xff] %v324
    %340 = vst [vmem:[#allocation2 + $0x28] sm:$0xff] %v327
    %341 = vst [vmem:[#allocation2 + $0x30] sm:$0xff] %v330
    %342 = vst [vmem:[#allocation2 + $0x38] sm:$0xff] %v333
    %v343 = vld [vmem:[%s6] sm:$0xff]
    %v344 = vld [vmem:[%s6 + $0x8] sm:$0xff]
    %v345 = vld [vmem:[%s6 + $0x10] sm:$0xff]
    %v346 = vld [vmem:[%s6 + $0x18] sm:$0xff]
    %v347 = vld [vmem:[#allocation9] sm:$0xff]
    %v348 = vld [vmem:[#allocation10] sm:$0xff]
    %v349 = vld [vmem:[#allocation2] sm:$0xff]
    %vm350 = vcmask 261120
    %v352 = vsel %vm350, %v347, 0
    %354 = vmatpush.msra.mxu0 0.0
    %355 = vmatpush.msra.mxu0 0.0
    %356 = vmatpush.msra.mxu0 0.0
    %357 = vmatpush.msra.mxu0 0.0
    %358 = vmatpush.msra.mxu0 0.0
    %359 = vmatpush.msra.mxu0 0.0
    %360 = vmatpush.msra.mxu0 0.0
    %361 = vmatpush.msra.mxu0 0.0
    %362 = vmatpush.msra.mxu0 0.0
    %363 = vmatpush.msra.mxu0 0.0
    %364 = vmatpush.msra.mxu0 0.0
    %365 = vmatpush.msra.mxu0 0.0
    %366 = vmatpush.msra.mxu0 %v346
    %367 = vmatpush.msra.mxu0 %v345
    %368 = vmatpush.msra.mxu0 %v344
    %369 = vmatpush.msra.mxu0 %v343
    %370 = vmatmul.f32.gmra.mxu0 %v352
    %v371 = vpop.f32.mrf.mxu0
    %v372 = vadd.f32 0.0, %v371
    %373 = vdwg.mxu0
    %v374 = vadd.f32 %v349, %v372
    %v375 = vxor.u32 %v374, 2147483648
    %v376 = vmul.f32 %v375, 1.442695
    %v377 = vpow.pop %v376
    %v378 = vadd.f32 %v377, 1.0
    %v379 = vrcp.pop %v378
    %v380 = vmul.f32 %v378, %v379
    %v381 = vsub.f32 1.0, %v380
    %v382 = vmul.f32 %v379, %v381
    %v383 = vadd.f32 %v379, %v382
    %vm384 = vweird.f32 %v378
    %vm385 = vweird.f32 %v379
    %vm386 = vmor %vm384, %vm385
    %v387 = vsel %vm386, %v379, %v383
    %v388 = vand.u32 2147483647, %v378
    %vm389 = vcmp.eq.f32.partialorder %v388, 8.507059e+37
    %v390 = vand.u32 %v378, 2147483648
    %v391 = vor.u32 1.1754944e-38, %v390
    %v392 = vsel %vm389, %v391, %v387
    %v393 = vmul.f32 1.0, %v392
    %v394 = vtanh.pop %v374
    %396 = vrot.lane.b32.xlu0 %v348, 32
    %v397 = vpop.permute.xlu0 %396
    %v399 = vmul.f32 %v393, %v397
    %401 = vrot.lane.b32.xlu0 %v394, 64
    %v402 = vpop.permute.xlu0 %401
    %v404 = vmul.f32 %v393, %v402
    %406 = vrot.lane.b32.xlu0 %v404, 32
    %v407 = vpop.permute.xlu0 %406
    %v409 = vadd.f32 %v399, %v407
    %v410 = vtanh.pop %v409
    %412 = vrot.lane.b32.xlu0 %v410, 64
    %v413 = vpop.permute.xlu0 %412
    %v415 = vmul.f32 %v393, %v413
    %417 = vrot.lane.b32.xlu0 %v415, 32
    %v418 = vpop.permute.xlu0 %417
    %420 = vst.msk [vmem:[#allocation3] sm:$0xff] %vm350, %v418
    %s421 = scalar_lea.vmem [#allocation2], 8
    %v422 = vld [vmem:[%s421] sm:$0xff]
    %v423 = vsel %vm350, %v418, 0
    %425 = vmatpush.msra.mxu0 0.0
    %426 = vmatpush.msra.mxu0 0.0
    %427 = vmatpush.msra.mxu0 0.0
    %428 = vmatpush.msra.mxu0 0.0
    %429 = vmatpush.msra.mxu0 0.0
    %430 = vmatpush.msra.mxu0 0.0
    %431 = vmatpush.msra.mxu0 0.0
    %432 = vmatpush.msra.mxu0 0.0
    %433 = vmatpush.msra.mxu0 0.0
    %434 = vmatpush.msra.mxu0 0.0
    %435 = vmatpush.msra.mxu0 0.0
    %436 = vmatpush.msra.mxu0 0.0
    %437 = vmatpush.msra.mxu0 %v346
    %438 = vmatpush.msra.mxu0 %v345
    %439 = vmatpush.msra.mxu0 %v344
    %440 = vmatpush.msra.mxu0 %v343
    %441 = vmatmul.f32.gmra.mxu0 %v423
    %v442 = vpop.f32.mrf.mxu0
    %v443 = vadd.f32 0.0, %v442
    %444 = vdwg.mxu0
    %v445 = vadd.f32 %v422, %v443
    %v446 = vxor.u32 %v445, 2147483648
    %v447 = vmul.f32 %v446, 1.442695
    %v448 = vpow.pop %v447
    %v449 = vadd.f32 %v448, 1.0
    %v450 = vrcp.pop %v449
    %v451 = vmul.f32 %v449, %v450
    %v452 = vsub.f32 1.0, %v451
    %v453 = vmul.f32 %v450, %v452
    %v454 = vadd.f32 %v450, %v453
    %vm455 = vweird.f32 %v449
    %vm456 = vweird.f32 %v450
    %vm457 = vmor %vm455, %vm456
    %v458 = vsel %vm457, %v450, %v454
    %v459 = vand.u32 2147483647, %v449
    %vm460 = vcmp.eq.f32.partialorder %v459, 8.507059e+37
    %v461 = vand.u32 %v449, 2147483648
    %v462 = vor.u32 1.1754944e-38, %v461
    %v463 = vsel %vm460, %v462, %v458
    %v464 = vmul.f32 1.0, %v463
    %v465 = vtanh.pop %v445
    %v466 = vmul.f32 %v464, %v409
    %468 = vrot.lane.b32.xlu0 %v465, 64
    %v469 = vpop.permute.xlu0 %468
    %v471 = vmul.f32 %v464, %v469
    %473 = vrot.lane.b32.xlu0 %v471, 32
    %v474 = vpop.permute.xlu0 %473
    %v476 = vadd.f32 %v466, %v474
    %v477 = vtanh.pop %v476
    %479 = vrot.lane.b32.xlu0 %v477, 64
    %v480 = vpop.permute.xlu0 %479
    %v482 = vmul.f32 %v464, %v480
    %484 = vrot.lane.b32.xlu0 %v482, 32
    %v485 = vpop.permute.xlu0 %484
    %s487 = scalar_lea.vmem [#allocation3], 8
    %488 = vst.msk [vmem:[%s487] sm:$0xff] %vm350, %v485
    %s489 = scalar_lea.vmem [#allocation2], 16
    %v490 = vld [vmem:[%s489] sm:$0xff]
    %v491 = vsel %vm350, %v485, 0
    %493 = vmatpush.msra.mxu0 0.0
    %494 = vmatpush.msra.mxu0 0.0
    %495 = vmatpush.msra.mxu0 0.0
    %496 = vmatpush.msra.mxu0 0.0
    %497 = vmatpush.msra.mxu0 0.0
    %498 = vmatpush.msra.mxu0 0.0
    %499 = vmatpush.msra.mxu0 0.0
    %500 = vmatpush.msra.mxu0 0.0
    %501 = vmatpush.msra.mxu0 0.0
    %502 = vmatpush.msra.mxu0 0.0
    %503 = vmatpush.msra.mxu0 0.0
    %504 = vmatpush.msra.mxu0 0.0
    %505 = vmatpush.msra.mxu0 %v346
    %506 = vmatpush.msra.mxu0 %v345
    %507 = vmatpush.msra.mxu0 %v344
    %508 = vmatpush.msra.mxu0 %v343
    %509 = vmatmul.f32.gmra.mxu0 %v491
    %v510 = vpop.f32.mrf.mxu0
    %v511 = vadd.f32 0.0, %v510
    %512 = vdwg.mxu0
    %v513 = vadd.f32 %v490, %v511
    %v514 = vxor.u32 %v513, 2147483648
    %v515 = vmul.f32 %v514, 1.442695
    %v516 = vpow.pop %v515
    %v517 = vadd.f32 %v516, 1.0
    %v518 = vrcp.pop %v517
    %v519 = vmul.f32 %v517, %v518
    %v520 = vsub.f32 1.0, %v519
    %v521 = vmul.f32 %v518, %v520
    %v522 = vadd.f32 %v518, %v521
    %vm523 = vweird.f32 %v517
    %vm524 = vweird.f32 %v518
    %vm525 = vmor %vm523, %vm524
    %v526 = vsel %vm525, %v518, %v522
    %v527 = vand.u32 2147483647, %v517
    %vm528 = vcmp.eq.f32.partialorder %v527, 8.507059e+37
    %v529 = vand.u32 %v517, 2147483648
    %v530 = vor.u32 1.1754944e-38, %v529
    %v531 = vsel %vm528, %v530, %v526
    %v532 = vmul.f32 1.0, %v531
    %v533 = vtanh.pop %v513
    %v534 = vmul.f32 %v532, %v476
    %536 = vrot.lane.b32.xlu0 %v533, 64
    %v537 = vpop.permute.xlu0 %536
    %v539 = vmul.f32 %v532, %v537
    %541 = vrot.lane.b32.xlu0 %v539, 32
    %v542 = vpop.permute.xlu0 %541
    %v544 = vadd.f32 %v534, %v542
    %v545 = vtanh.pop %v544
    %547 = vrot.lane.b32.xlu0 %v545, 64
    %v548 = vpop.permute.xlu0 %547
    %v550 = vmul.f32 %v532, %v548
    %552 = vrot.lane.b32.xlu0 %v550, 32
    %v553 = vpop.permute.xlu0 %552
    %s555 = scalar_lea.vmem [#allocation3], 16
    %556 = vst.msk [vmem:[%s555] sm:$0xff] %vm350, %v553
    %s557 = scalar_lea.vmem [#allocation2], 24
    %v558 = vld [vmem:[%s557] sm:$0xff]
    %v559 = vsel %vm350, %v553, 0
    %561 = vmatpush.msra.mxu0 0.0
    %562 = vmatpush.msra.mxu0 0.0
    %563 = vmatpush.msra.mxu0 0.0
    %564 = vmatpush.msra.mxu0 0.0
    %565 = vmatpush.msra.mxu0 0.0
    %566 = vmatpush.msra.mxu0 0.0
    %567 = vmatpush.msra.mxu0 0.0
    %568 = vmatpush.msra.mxu0 0.0
    %569 = vmatpush.msra.mxu0 0.0
    %570 = vmatpush.msra.mxu0 0.0
    %571 = vmatpush.msra.mxu0 0.0
    %572 = vmatpush.msra.mxu0 0.0
    %573 = vmatpush.msra.mxu0 %v346
    %574 = vmatpush.msra.mxu0 %v345
    %575 = vmatpush.msra.mxu0 %v344
    %576 = vmatpush.msra.mxu0 %v343
    %577 = vmatmul.f32.gmra.mxu0 %v559
    %v578 = vpop.f32.mrf.mxu0
    %v579 = vadd.f32 0.0, %v578
    %580 = vdwg.mxu0
    %v581 = vadd.f32 %v558, %v579
    %v582 = vxor.u32 %v581, 2147483648
    %v583 = vmul.f32 %v582, 1.442695
    %v584 = vpow.pop %v583
    %v585 = vadd.f32 %v584, 1.0
    %v586 = vrcp.pop %v585
    %v587 = vmul.f32 %v585, %v586
    %v588 = vsub.f32 1.0, %v587
    %v589 = vmul.f32 %v586, %v588
    %v590 = vadd.f32 %v586, %v589
    %vm591 = vweird.f32 %v585
    %vm592 = vweird.f32 %v586
    %vm593 = vmor %vm591, %vm592
    %v594 = vsel %vm593, %v586, %v590
    %v595 = vand.u32 2147483647, %v585
    %vm596 = vcmp.eq.f32.partialorder %v595, 8.507059e+37
    %v597 = vand.u32 %v585, 2147483648
    %v598 = vor.u32 1.1754944e-38, %v597
    %v599 = vsel %vm596, %v598, %v594
    %v600 = vmul.f32 1.0, %v599
    %v601 = vtanh.pop %v581
    %v602 = vmul.f32 %v600, %v544
    %604 = vrot.lane.b32.xlu0 %v601, 64
    %v605 = vpop.permute.xlu0 %604
    %v607 = vmul.f32 %v600, %v605
    %609 = vrot.lane.b32.xlu0 %v607, 32
    %v610 = vpop.permute.xlu0 %609
    %v612 = vadd.f32 %v602, %v610
    %v613 = vtanh.pop %v612
    %615 = vrot.lane.b32.xlu0 %v613, 64
    %v616 = vpop.permute.xlu0 %615
    %v618 = vmul.f32 %v600, %v616
    %620 = vrot.lane.b32.xlu0 %v618, 32
    %v621 = vpop.permute.xlu0 %620
    %s623 = scalar_lea.vmem [#allocation3], 24
    %624 = vst.msk [vmem:[%s623] sm:$0xff] %vm350, %v621
    %s625 = scalar_lea.vmem [#allocation2], 32
    %v626 = vld [vmem:[%s625] sm:$0xff]
    %v627 = vsel %vm350, %v621, 0
    %629 = vmatpush.msra.mxu0 0.0
    %630 = vmatpush.msra.mxu0 0.0
    %631 = vmatpush.msra.mxu0 0.0
    %632 = vmatpush.msra.mxu0 0.0
    %633 = vmatpush.msra.mxu0 0.0
    %634 = vmatpush.msra.mxu0 0.0
    %635 = vmatpush.msra.mxu0 0.0
    %636 = vmatpush.msra.mxu0 0.0
    %637 = vmatpush.msra.mxu0 0.0
    %638 = vmatpush.msra.mxu0 0.0
    %639 = vmatpush.msra.mxu0 0.0
    %640 = vmatpush.msra.mxu0 0.0
    %641 = vmatpush.msra.mxu0 %v346
    %642 = vmatpush.msra.mxu0 %v345
    %643 = vmatpush.msra.mxu0 %v344
    %644 = vmatpush.msra.mxu0 %v343
    %645 = vmatmul.f32.gmra.mxu0 %v627
    %v646 = vpop.f32.mrf.mxu0
    %v647 = vadd.f32 0.0, %v646
    %648 = vdwg.mxu0
    %v649 = vadd.f32 %v626, %v647
    %v650 = vxor.u32 %v649, 2147483648
    %v651 = vmul.f32 %v650, 1.442695
    %v652 = vpow.pop %v651
    %v653 = vadd.f32 %v652, 1.0
    %v654 = vrcp.pop %v653
    %v655 = vmul.f32 %v653, %v654
    %v656 = vsub.f32 1.0, %v655
    %v657 = vmul.f32 %v654, %v656
    %v658 = vadd.f32 %v654, %v657
    %vm659 = vweird.f32 %v653
    %vm660 = vweird.f32 %v654
    %vm661 = vmor %vm659, %vm660
    %v662 = vsel %vm661, %v654, %v658
    %v663 = vand.u32 2147483647, %v653
    %vm664 = vcmp.eq.f32.partialorder %v663, 8.507059e+37
    %v665 = vand.u32 %v653, 2147483648
    %v666 = vor.u32 1.1754944e-38, %v665
    %v667 = vsel %vm664, %v666, %v662
    %v668 = vmul.f32 1.0, %v667
    %v669 = vtanh.pop %v649
    %v670 = vmul.f32 %v668, %v612
    %672 = vrot.lane.b32.xlu0 %v669, 64
    %v673 = vpop.permute.xlu0 %672
    %v675 = vmul.f32 %v668, %v673
    %677 = vrot.lane.b32.xlu0 %v675, 32
    %v678 = vpop.permute.xlu0 %677
    %v680 = vadd.f32 %v670, %v678
    %v681 = vtanh.pop %v680
    %683 = vrot.lane.b32.xlu0 %v681, 64
    %v684 = vpop.permute.xlu0 %683
    %v686 = vmul.f32 %v668, %v684
    %688 = vrot.lane.b32.xlu0 %v686, 32
    %v689 = vpop.permute.xlu0 %688
    %s691 = scalar_lea.vmem [#allocation3], 32
    %692 = vst.msk [vmem:[%s691] sm:$0xff] %vm350, %v689
    %s693 = scalar_lea.vmem [#allocation2], 40
    %v694 = vld [vmem:[%s693] sm:$0xff]
    %v695 = vsel %vm350, %v689, 0
    %697 = vmatpush.msra.mxu0 0.0
    %698 = vmatpush.msra.mxu0 0.0
    %699 = vmatpush.msra.mxu0 0.0
    %700 = vmatpush.msra.mxu0 0.0
    %701 = vmatpush.msra.mxu0 0.0
    %702 = vmatpush.msra.mxu0 0.0
    %703 = vmatpush.msra.mxu0 0.0
    %704 = vmatpush.msra.mxu0 0.0
    %705 = vmatpush.msra.mxu0 0.0
    %706 = vmatpush.msra.mxu0 0.0
    %707 = vmatpush.msra.mxu0 0.0
    %708 = vmatpush.msra.mxu0 0.0
    %709 = vmatpush.msra.mxu0 %v346
    %710 = vmatpush.msra.mxu0 %v345
    %711 = vmatpush.msra.mxu0 %v344
    %712 = vmatpush.msra.mxu0 %v343
    %713 = vmatmul.f32.gmra.mxu0 %v695
    %v714 = vpop.f32.mrf.mxu0
    %v715 = vadd.f32 0.0, %v714
    %716 = vdwg.mxu0
    %v717 = vadd.f32 %v694, %v715
    %v718 = vxor.u32 %v717, 2147483648
    %v719 = vmul.f32 %v718, 1.442695
    %v720 = vpow.pop %v719
    %v721 = vadd.f32 %v720, 1.0
    %v722 = vrcp.pop %v721
    %v723 = vmul.f32 %v721, %v722
    %v724 = vsub.f32 1.0, %v723
    %v725 = vmul.f32 %v722, %v724
    %v726 = vadd.f32 %v722, %v725
    %vm727 = vweird.f32 %v721
    %vm728 = vweird.f32 %v722
    %vm729 = vmor %vm727, %vm728
    %v730 = vsel %vm729, %v722, %v726
    %v731 = vand.u32 2147483647, %v721
    %vm732 = vcmp.eq.f32.partialorder %v731, 8.507059e+37
    %v733 = vand.u32 %v721, 2147483648
    %v734 = vor.u32 1.1754944e-38, %v733
    %v735 = vsel %vm732, %v734, %v730
    %v736 = vmul.f32 1.0, %v735
    %v737 = vtanh.pop %v717
    %v738 = vmul.f32 %v736, %v680
    %740 = vrot.lane.b32.xlu0 %v737, 64
    %v741 = vpop.permute.xlu0 %740
    %v743 = vmul.f32 %v736, %v741
    %745 = vrot.lane.b32.xlu0 %v743, 32
    %v746 = vpop.permute.xlu0 %745
    %v748 = vadd.f32 %v738, %v746
    %v749 = vtanh.pop %v748
    %751 = vrot.lane.b32.xlu0 %v749, 64
    %v752 = vpop.permute.xlu0 %751
    %v754 = vmul.f32 %v736, %v752
    %756 = vrot.lane.b32.xlu0 %v754, 32
    %v757 = vpop.permute.xlu0 %756
    %s759 = scalar_lea.vmem [#allocation3], 40
    %760 = vst.msk [vmem:[%s759] sm:$0xff] %vm350, %v757
    %s761 = scalar_lea.vmem [#allocation2], 48
    %v762 = vld [vmem:[%s761] sm:$0xff]
    %v763 = vsel %vm350, %v757, 0
    %765 = vmatpush.msra.mxu0 0.0
    %766 = vmatpush.msra.mxu0 0.0
    %767 = vmatpush.msra.mxu0 0.0
    %768 = vmatpush.msra.mxu0 0.0
    %769 = vmatpush.msra.mxu0 0.0
    %770 = vmatpush.msra.mxu0 0.0
    %771 = vmatpush.msra.mxu0 0.0
    %772 = vmatpush.msra.mxu0 0.0
    %773 = vmatpush.msra.mxu0 0.0
    %774 = vmatpush.msra.mxu0 0.0
    %775 = vmatpush.msra.mxu0 0.0
    %776 = vmatpush.msra.mxu0 0.0
    %777 = vmatpush.msra.mxu0 %v346
    %778 = vmatpush.msra.mxu0 %v345
    %779 = vmatpush.msra.mxu0 %v344
    %780 = vmatpush.msra.mxu0 %v343
    %781 = vmatmul.f32.gmra.mxu0 %v763
    %v782 = vpop.f32.mrf.mxu0
    %v783 = vadd.f32 0.0, %v782
    %784 = vdwg.mxu0
    %v785 = vadd.f32 %v762, %v783
    %v786 = vxor.u32 %v785, 2147483648
    %v787 = vmul.f32 %v786, 1.442695
    %v788 = vpow.pop %v787
    %v789 = vadd.f32 %v788, 1.0
    %v790 = vrcp.pop %v789
    %v791 = vmul.f32 %v789, %v790
    %v792 = vsub.f32 1.0, %v791
    %v793 = vmul.f32 %v790, %v792
    %v794 = vadd.f32 %v790, %v793
    %vm795 = vweird.f32 %v789
    %vm796 = vweird.f32 %v790
    %vm797 = vmor %vm795, %vm796
    %v798 = vsel %vm797, %v790, %v794
    %v799 = vand.u32 2147483647, %v789
    %vm800 = vcmp.eq.f32.partialorder %v799, 8.507059e+37
    %v801 = vand.u32 %v789, 2147483648
    %v802 = vor.u32 1.1754944e-38, %v801
    %v803 = vsel %vm800, %v802, %v798
    %v804 = vmul.f32 1.0, %v803
    %v805 = vtanh.pop %v785
    %v806 = vmul.f32 %v804, %v748
    %808 = vrot.lane.b32.xlu0 %v805, 64
    %v809 = vpop.permute.xlu0 %808
    %v811 = vmul.f32 %v804, %v809
    %813 = vrot.lane.b32.xlu0 %v811, 32
    %v814 = vpop.permute.xlu0 %813
    %v816 = vadd.f32 %v806, %v814
    %v817 = vtanh.pop %v816
    %819 = vrot.lane.b32.xlu0 %v817, 64
    %v820 = vpop.permute.xlu0 %819
    %v822 = vmul.f32 %v804, %v820
    %824 = vrot.lane.b32.xlu0 %v822, 32
    %v825 = vpop.permute.xlu0 %824
    %s827 = scalar_lea.vmem [#allocation3], 48
    %828 = vst.msk [vmem:[%s827] sm:$0xff] %vm350, %v825
    %s829 = scalar_lea.vmem [#allocation2], 56
    %v830 = vld [vmem:[%s829] sm:$0xff]
    %v831 = vsel %vm350, %v825, 0
    %833 = vmatpush.msra.mxu0 0.0
    %834 = vmatpush.msra.mxu0 0.0
    %835 = vmatpush.msra.mxu0 0.0
    %836 = vmatpush.msra.mxu0 0.0
    %837 = vmatpush.msra.mxu0 0.0
    %838 = vmatpush.msra.mxu0 0.0
    %839 = vmatpush.msra.mxu0 0.0
    %840 = vmatpush.msra.mxu0 0.0
    %841 = vmatpush.msra.mxu0 0.0
    %842 = vmatpush.msra.mxu0 0.0
    %843 = vmatpush.msra.mxu0 0.0
    %844 = vmatpush.msra.mxu0 0.0
    %845 = vmatpush.msra.mxu0 %v346
    %846 = vmatpush.msra.mxu0 %v345
    %847 = vmatpush.msra.mxu0 %v344
    %848 = vmatpush.msra.mxu0 %v343
    %849 = vmatmul.f32.gmra.mxu0 %v831
    %v850 = vpop.f32.mrf.mxu0
    %v851 = vadd.f32 0.0, %v850
    %852 = vdwg.mxu0
    %v853 = vadd.f32 %v830, %v851
    %v854 = vxor.u32 %v853, 2147483648
    %v855 = vmul.f32 %v854, 1.442695
    %v856 = vpow.pop %v855
    %v857 = vadd.f32 %v856, 1.0
    %v858 = vrcp.pop %v857
    %v859 = vmul.f32 %v857, %v858
    %v860 = vsub.f32 1.0, %v859
    %v861 = vmul.f32 %v858, %v860
    %v862 = vadd.f32 %v858, %v861
    %vm863 = vweird.f32 %v857
    %vm864 = vweird.f32 %v858
    %vm865 = vmor %vm863, %vm864
    %v866 = vsel %vm865, %v858, %v862
    %v867 = vand.u32 2147483647, %v857
    %vm868 = vcmp.eq.f32.partialorder %v867, 8.507059e+37
    %v869 = vand.u32 %v857, 2147483648
    %v870 = vor.u32 1.1754944e-38, %v869
    %v871 = vsel %vm868, %v870, %v866
    %v872 = vmul.f32 1.0, %v871
    %v873 = vtanh.pop %v853
    %v874 = vmul.f32 %v872, %v816
    %876 = vrot.lane.b32.xlu0 %v873, 64
    %v877 = vpop.permute.xlu0 %876
    %v879 = vmul.f32 %v872, %v877
    %881 = vrot.lane.b32.xlu0 %v879, 32
    %v882 = vpop.permute.xlu0 %881
    %v884 = vadd.f32 %v874, %v882
    %v885 = vtanh.pop %v884
    %887 = vrot.lane.b32.xlu0 %v885, 64
    %v888 = vpop.permute.xlu0 %887
    %v890 = vmul.f32 %v872, %v888
    %892 = vrot.lane.b32.xlu0 %v890, 32
    %v893 = vpop.permute.xlu0 %892
    %s895 = scalar_lea.vmem [#allocation3], 56
    %896 = vst.msk [vmem:[%s895] sm:$0xff] %vm350, %v893
    %897 = vst.msk [vmem:[#allocation9] sm:$0xff] %vm350, %v893
    %899 = vrot.lane.b32.xlu0 %v884, 96
    %v900 = vpop.permute.xlu0 %899
    %902 = vst.msk [vmem:[#allocation10] sm:$0xff] %vm350, %v900
    %v903 = vld [vmem:[#allocation3] sm:$0xff]
    %v904 = vld [vmem:[#allocation3 + $0x8] sm:$0xff]
    %v905 = vld [vmem:[#allocation3 + $0x10] sm:$0xff]
    %v906 = vld [vmem:[#allocation3 + $0x18] sm:$0xff]
    %v907 = vld [vmem:[#allocation3 + $0x20] sm:$0xff]
    %v908 = vld [vmem:[#allocation3 + $0x28] sm:$0xff]
    %v909 = vld [vmem:[#allocation3 + $0x30] sm:$0xff]
    %v910 = vld [vmem:[#allocation3 + $0x38] sm:$0xff]
    %v911 = vld [vmem:[%s8] sm:$0xff]
    %v912 = vld [vmem:[%s8 + $0x8] sm:$0xff]
    %v913 = vld [vmem:[%s8 + $0x10] sm:$0xff]
    %v914 = vld [vmem:[%s8 + $0x18] sm:$0xff]
    %v915 = vld [vmem:[%s9] sm:$0x1]
    %v917 = vperm.slane %v915, 0
    %v920 = vsel %vm350, %v903, 0
    %v923 = vsel %vm350, %v904, 0
    %v926 = vsel %vm350, %v905, 0
    %v929 = vsel %vm350, %v906, 0
    %v932 = vsel %vm350, %v907, 0
    %v935 = vsel %vm350, %v908, 0
    %v938 = vsel %vm350, %v909, 0
    %v941 = vsel %vm350, %v910, 0
    %943 = vmatpush.msra.mxu0 0.0
    %944 = vmatpush.msra.mxu0 0.0
    %945 = vmatpush.msra.mxu0 0.0
    %946 = vmatpush.msra.mxu0 0.0
    %947 = vmatpush.msra.mxu0 0.0
    %948 = vmatpush.msra.mxu0 0.0
    %949 = vmatpush.msra.mxu0 0.0
    %950 = vmatpush.msra.mxu0 0.0
    %951 = vmatpush.msra.mxu0 0.0
    %952 = vmatpush.msra.mxu0 0.0
    %953 = vmatpush.msra.mxu0 0.0
    %954 = vmatpush.msra.mxu0 0.0
    %955 = vmatpush.msra.mxu0 %v914
    %956 = vmatpush.msra.mxu0 %v913
    %957 = vmatpush.msra.mxu0 %v912
    %958 = vmatpush.msra.mxu0 %v911
    %959 = vmatmul.f32.gmra.mxu0 %v920
    %v960 = vpop.f32.mrf.mxu0
    %v961 = vadd.f32 %v917, %v960
    %962 = vmatmul.f32.gmra.mxu0 %v923
    %v963 = vpop.f32.mrf.mxu0
    %v964 = vadd.f32 %v917, %v963
    %965 = vmatmul.f32.gmra.mxu0 %v926
    %v966 = vpop.f32.mrf.mxu0
    %v967 = vadd.f32 %v917, %v966
    %968 = vmatmul.f32.gmra.mxu0 %v929
    %v969 = vpop.f32.mrf.mxu0
    %v970 = vadd.f32 %v917, %v969
    %971 = vmatmul.f32.gmra.mxu0 %v932
    %v972 = vpop.f32.mrf.mxu0
    %v973 = vadd.f32 %v917, %v972
    %974 = vmatmul.f32.gmra.mxu0 %v935
    %v975 = vpop.f32.mrf.mxu0
    %v976 = vadd.f32 %v917, %v975
    %977 = vmatmul.f32.gmra.mxu0 %v938
    %v978 = vpop.f32.mrf.mxu0
    %v979 = vadd.f32 %v917, %v978
    %980 = vmatmul.f32.gmra.mxu0 %v941
    %v981 = vpop.f32.mrf.mxu0
    %v982 = vadd.f32 %v917, %v981
    %983 = vdwg.mxu0
    %vm984 = vcmask 130048
    %985 = vst.msk [vmem:[%s10] sm:$0xff] %vm984, %v961
    %986 = vst.msk [vmem:[%s10 + $0x8] sm:$0xff] %vm984, %v964
    %987 = vst.msk [vmem:[%s10 + $0x10] sm:$0xff] %vm984, %v967
    %988 = vst.msk [vmem:[%s10 + $0x18] sm:$0xff] %vm984, %v970
    %989 = vst.msk [vmem:[%s10 + $0x20] sm:$0xff] %vm984, %v973
    %990 = vst.msk [vmem:[%s10 + $0x28] sm:$0xff] %vm984, %v976
    %991 = vst.msk [vmem:[%s10 + $0x30] sm:$0xff] %vm984, %v979
    %992 = vst.msk [vmem:[%s10 + $0x38] sm:$0xff] %vm984, %v982
    // Predicated region
    $region54: #{tpu_custom_call.1} parent=1 // pred_check
      _
    $region55: #{tpu_custom_call.1} parent=1 // pred_check_branch
      %994 = sbr.rel (0) target = $region57
    $region56: #{tpu_custom_call.1} parent=1 // pred_region
      _
    $region57: #{tpu_custom_call.1} parent=1 // pred_fallthru
      _
    // Predicated region
    $region58: #{tpu_custom_call.1} parent=1 // pred_check
      _
    $region59: #{tpu_custom_call.1} parent=1 // pred_check_branch
      %996 = sbr.rel (0) target = $region61
    $region60: #{tpu_custom_call.1} parent=1 // pred_region
      %998 = vsyncadd [#allocation6], 0
      %s1000 = sshll.u32 [#allocation9], 4
      %s1001 = int_to_ptr.vmem [resolvable:$true] %s1000
      %s1002 = sshll.u32 %s11, 4
      %s1003 = int_to_ptr.hbm [resolvable:$true] %s1002
      %1005 = dma.vmem_to_hbm [thread:$0]  %s1001, 128, %s1003, [#allocation6]
    $region61: #{tpu_custom_call.1} parent=1 // pred_fallthru
      _
    // Predicated region
    $region62: #{tpu_custom_call.1} parent=1 // pred_check
      _
    $region63: #{tpu_custom_call.1} parent=1 // pred_check_branch
      %1007 = sbr.rel (0) target = $region65
    $region64: #{tpu_custom_call.1} parent=1 // pred_region
      %1009 = vsyncadd [#allocation11], 0
      %s1011 = sshll.u32 [#allocation10], 4
      %s1012 = int_to_ptr.vmem [resolvable:$true] %s1011
      %s1013 = sshll.u32 %s12, 4
      %s1014 = int_to_ptr.hbm [resolvable:$true] %s1013
      %1016 = dma.vmem_to_hbm [thread:$0]  %s1012, 128, %s1014, [#allocation11]
    $region65: #{tpu_custom_call.1} parent=1 // pred_fallthru
      _
    // Predicated region
    $region66: #{tpu_custom_call.1} parent=1 // pred_check
      _
    $region67: #{tpu_custom_call.1} parent=1 // pred_check_branch
      %1018 = sbr.rel (0) target = $region69
    $region68: #{tpu_custom_call.1} parent=1 // pred_region
      _
    $region69: #{tpu_custom_call.1} parent=1 // pred_fallthru
      _
    // Predicated region
    $region70: #{tpu_custom_call.1} parent=1 // pred_check
      _
    $region71: #{tpu_custom_call.1} parent=1 // pred_check_branch
      %1020 = sbr.rel (0) target = $region73
    $region72: #{tpu_custom_call.1} parent=1 // pred_region
      %1022 = dma.done [#allocation6], 128
    $region73: #{tpu_custom_call.1} parent=1 // pred_fallthru
      _
    // Predicated region
    $region74: #{tpu_custom_call.1} parent=1 // pred_check
      _
    $region75: #{tpu_custom_call.1} parent=1 // pred_check_branch
      %1024 = sbr.rel (0) target = $region77
    $region76: #{tpu_custom_call.1} parent=1 // pred_region
      %1026 = dma.done [#allocation11], 128
    $region77: #{tpu_custom_call.1} parent=1 // pred_fallthru
      _
    %1027 = vsyncpa [#allocation5], 1
    %1028 = vsyncpa [#allocation8], 1
    %1029 = vsyncpa [#allocation6], 1
    %1030 = vsyncpa [#allocation11], 1

</llo_original>
